<compile_context>
chip_gen: v5e
topology: v5e:2x2
jax: 0.10.0
libtpu: 0.0.40
codegen_flags: <defaults>
</compile_context>

<pallas_src>
import jax
import jax.numpy as jnp
from jax.experimental import pallas as pl
from jax.experimental.pallas import tpu as pltpu


def _round_up(v, m):
    return (v + m - 1) // m * m


def _vmem_limit_bytes():
    """Generation-aware scoped-VMEM limit (None -> compiler default)."""
    try:
        phys = int(pltpu.get_tpu_info().vmem_capacity_bytes)
    except Exception:
        return None
    # Leave headroom for internal scratch / slice temporaries; never ask for
    # more than ~100 MiB even on 128 MiB parts (v5e/v6e); ~48 MiB on v7x.
    return int(min(max(phys - 16 * 1024 * 1024, 16 * 1024 * 1024),
                   100 * 1024 * 1024))


def _pick_batch_tile(N, D, hp, wp, vmem_budget_bytes):
    """Largest divisor of N whose block comfortably fits the VMEM budget."""
    # Per-plane VMEM footprint (f32 compute, (8,128) tile rounding in VMEM).
    plane = _round_up(hp, 8) * _round_up(wp, 128) * 4
    # 3 inputs + 1 output, double-buffered, plus ~6 full-plane temporaries.
    per_plane = (3 + 1) * 2 * plane + 6 * plane
    nb = max(1, min(N, vmem_budget_bytes // per_plane))
    if D == 1 and N >= 2:
        # Keep at least two grid steps so the v7x megacore has work to split.
        nb = min(nb, max(1, N // 2))
    while N % nb:
        nb -= 1
    return max(nb, 1)


def _share_conv_kernel(w_ref, x_ref, y_ref, z_ref, o_ref):
    # w_ref: (D*27,) f32 in SMEM, flattened as (depth, channel, kh, kw).
    # x_ref / y_ref / z_ref: (nb, H+2, W+2) VMEM blocks (halo already padded).
    # o_ref: (nb, H, W) VMEM block.
    d = pl.program_id(0)
    nb, hp, wp = x_ref.shape
    H, W = hp - 2, wp - 2
    base = d * 27

    for n in range(nb):                       # static loop over batch planes
        plane_sum = None
        for c, ref in enumerate((x_ref, y_ref, z_ref)):
            p = ref[n].astype(jnp.float32)    # (H+2, W+2) full padded plane
            ch_sum = None
            for di in range(3):
                for dj in range(3):
                    w = w_ref[base + c * 9 + di * 3 + dj]
                    term = w * p[di:di + H, dj:dj + W]
                    ch_sum = term if ch_sum is None else ch_sum + term
            plane_sum = ch_sum if plane_sum is None else plane_sum + ch_sum
        o_ref[n] = plane_sum.astype(o_ref.dtype)


def share_module_forward(x, y, z, weights):
    """x, y, z: (N, D, H, W); weights: (D, 3, 3, 3)  ->  (N, D, H, W)."""
    N, D, H, W = x.shape
    assert y.shape == x.shape and z.shape == x.shape, "wrong input dimension"
    assert x.shape[1] == y.shape[1] == z.shape[1] == D
    assert weights.shape == (D, 3, 3, 3)

    hp, wp = H + 2, W + 2                     # +1 halo only, no 8/128 padding

    def prep(a):                              # zero halo for the padding=1 conv
        return jnp.pad(a, ((0, 0), (0, 0), (1, 1), (1, 1)))

    xp, yp, zp = prep(x), prep(y), prep(z)
    w_flat = weights.reshape(D * 27).astype(jnp.float32)   # 1-D SMEM layout

    vmem_limit = _vmem_limit_bytes()
    budget = (vmem_limit or 48 * 1024 * 1024) // 2
    nb = _pick_batch_tile(N, D, hp, wp, budget)

    in_blk = pl.BlockSpec((nb, None, hp, wp), lambda d, b: (b, d, 0, 0))
    out_blk = pl.BlockSpec((nb, None, H, W), lambda d, b: (b, d, 0, 0))

    grid_spec = pltpu.PrefetchScalarGridSpec(
        num_scalar_prefetch=0,
        grid=(D, N // nb),
        in_specs=[
            pl.BlockSpec(memory_space=pltpu.MemorySpace.SMEM),   # weights
            in_blk, in_blk, in_blk,
        ],
        out_specs=out_blk,
    )

    # TODO(synk): for a single gigantic image (one batch plane alone overflows
    # VMEM) additionally tile H inside the plane with a 2-row halo.
    return pl.pallas_call(
        _share_conv_kernel,
        out_shape=jax.ShapeDtypeStruct((N, D, H, W), x.dtype),
        grid_spec=grid_spec,
        compiler_params=pltpu.CompilerParams(
            dimension_semantics=("parallel", "parallel"),
            vmem_limit_bytes=vmem_limit,
        ),
    )(w_flat, xp, yp, zp)


def _reference(x, y, z, weights):
    """Pure-JAX reference: per-depth Conv2d(3->1, 3x3, pad=1, no bias)."""
    N, D, H, W = x.shape
    outs = []
    for i in range(D):
        tmp = jnp.stack([x[:, i], y[:, i], z[:, i]], axis=1)      # (N, 3, H, W)
        k = weights[i][None]                                       # (1, 3, 3, 3)
        dn = jax.lax.conv_dimension_numbers(tmp.shape, k.shape,
                                            ("NCHW", "OIHW", "NCHW"))
        outs.append(jax.lax.conv_general_dilated(
            tmp, k, (1, 1), ((1, 1), (1, 1)), dimension_numbers=dn,
            precision=jax.lax.Precision.HIGHEST))
    return jnp.concatenate(outs, axis=1)                           # (N, D, H, W)


if __name__ == "__main__":
    key = jax.random.PRNGKey(0)
    kx, ky, kz, kw = jax.random.split(key, 4)
    N, D, H, W = 2, 4, 16, 16
    x = jax.random.normal(kx, (N, D, H, W), dtype=jnp.float32)
    y = jax.random.normal(ky, (N, D, H, W), dtype=jnp.float32)
    z = jax.random.normal(kz, (N, D, H, W), dtype=jnp.float32)
    # stand-in for the module's `depth` Conv2d(3,1,3,3) weights (no bias)
    w = jax.random.normal(kw, (D, 3, 3, 3), dtype=jnp.float32) * (1.0 / 3.0)

    out = share_module_forward(x, y, z, w)
    jax.block_until_ready(out)
    assert out.shape == (N, D, H, W)

    ref = _reference(x, y, z, w)
    assert jnp.allclose(out, ref, atol=1e-4, rtol=1e-4), "share_module mismatch"
    print("KERNEL_OK")
</pallas_src>

<mosaic_0001>
module attributes {stable_mosaic.version = 11 : i64} {
  func.func @_share_conv_kernel(%arg0: i32, %arg1: i32, %arg2: memref<108xf32, #tpu.memory_space<smem>>, %arg3: memref<2x1x18x18xf32, #tpu.memory_space<vmem>>, %arg4: memref<2x1x18x18xf32, #tpu.memory_space<vmem>>, %arg5: memref<2x1x18x18xf32, #tpu.memory_space<vmem>>, %arg6: memref<2x1x16x16xf32, #tpu.memory_space<vmem>>) attributes {dimension_semantics = [#tpu.dimension_semantics<parallel>, #tpu.dimension_semantics<parallel>], iteration_bounds = array<i64: 4, 1>, scalar_prefetch = 0 : i64, scratch_operands = 0 : i64, tpu.core_type = #tpu.core_type<tc>, window_params = [{transform_indices = @transform_0, window_bounds = array<i64: 108>}, {transform_indices = @transform_1, window_bounds = array<i64: 2, 1, 18, 18>}, {transform_indices = @transform_2, window_bounds = array<i64: 2, 1, 18, 18>}, {transform_indices = @transform_3, window_bounds = array<i64: 2, 1, 18, 18>}, {transform_indices = @transform_4, window_bounds = array<i64: 2, 1, 16, 16>}]} {
    %c27_i32 = arith.constant 27 : i32
    %0 = arith.muli %arg0, %c27_i32 : i32
    %c0 = arith.constant 0 : index
    %c0_0 = arith.constant 0 : index
    %c0_1 = arith.constant 0 : index
    %c0_2 = arith.constant 0 : index
    %1 = vector.load %arg3[%c0, %c0_0, %c0_1, %c0_2] : memref<2x1x18x18xf32, #tpu.memory_space<vmem>>, vector<1x1x18x18xf32>
    %2 = vector.shape_cast %1 : vector<1x1x18x18xf32> to vector<18x18xf32>
    %c0_i32 = arith.constant 0 : i32
    %3 = arith.addi %0, %c0_i32 : i32
    %c0_i32_3 = arith.constant 0 : i32
    %4 = arith.addi %3, %c0_i32_3 : i32
    %c0_i32_4 = arith.constant 0 : i32
    %5 = arith.addi %4, %c0_i32_4 : i32
    %6 = arith.index_cast %5 : i32 to index
    %7 = memref.load %arg2[%6] : memref<108xf32, #tpu.memory_space<smem>>
    %8 = vector.extract_strided_slice %2 {offsets = [0, 0], sizes = [16, 16], strides = [1, 1]} : vector<18x18xf32> to vector<16x16xf32>
    %9 = vector.broadcast %7 : f32 to vector<16x16xf32>
    %10 = arith.mulf %9, %8 : vector<16x16xf32>
    %c0_i32_5 = arith.constant 0 : i32
    %11 = arith.addi %0, %c0_i32_5 : i32
    %c0_i32_6 = arith.constant 0 : i32
    %12 = arith.addi %11, %c0_i32_6 : i32
    %c1_i32 = arith.constant 1 : i32
    %13 = arith.addi %12, %c1_i32 : i32
    %14 = arith.index_cast %13 : i32 to index
    %15 = memref.load %arg2[%14] : memref<108xf32, #tpu.memory_space<smem>>
    %16 = vector.extract_strided_slice %2 {offsets = [0, 1], sizes = [16, 16], strides = [1, 1]} : vector<18x18xf32> to vector<16x16xf32>
    %17 = vector.broadcast %15 : f32 to vector<16x16xf32>
    %18 = arith.mulf %17, %16 : vector<16x16xf32>
    %19 = arith.addf %10, %18 : vector<16x16xf32>
    %c0_i32_7 = arith.constant 0 : i32
    %20 = arith.addi %0, %c0_i32_7 : i32
    %c0_i32_8 = arith.constant 0 : i32
    %21 = arith.addi %20, %c0_i32_8 : i32
    %c2_i32 = arith.constant 2 : i32
    %22 = arith.addi %21, %c2_i32 : i32
    %23 = arith.index_cast %22 : i32 to index
    %24 = memref.load %arg2[%23] : memref<108xf32, #tpu.memory_space<smem>>
    %25 = vector.extract_strided_slice %2 {offsets = [0, 2], sizes = [16, 16], strides = [1, 1]} : vector<18x18xf32> to vector<16x16xf32>
    %26 = vector.broadcast %24 : f32 to vector<16x16xf32>
    %27 = arith.mulf %26, %25 : vector<16x16xf32>
    %28 = arith.addf %19, %27 : vector<16x16xf32>
    %c0_i32_9 = arith.constant 0 : i32
    %29 = arith.addi %0, %c0_i32_9 : i32
    %c3_i32 = arith.constant 3 : i32
    %30 = arith.addi %29, %c3_i32 : i32
    %c0_i32_10 = arith.constant 0 : i32
    %31 = arith.addi %30, %c0_i32_10 : i32
    %32 = arith.index_cast %31 : i32 to index
    %33 = memref.load %arg2[%32] : memref<108xf32, #tpu.memory_space<smem>>
    %34 = vector.extract_strided_slice %2 {offsets = [1, 0], sizes = [16, 16], strides = [1, 1]} : vector<18x18xf32> to vector<16x16xf32>
    %35 = vector.broadcast %33 : f32 to vector<16x16xf32>
    %36 = arith.mulf %35, %34 : vector<16x16xf32>
    %37 = arith.addf %28, %36 : vector<16x16xf32>
    %c0_i32_11 = arith.constant 0 : i32
    %38 = arith.addi %0, %c0_i32_11 : i32
    %c3_i32_12 = arith.constant 3 : i32
    %39 = arith.addi %38, %c3_i32_12 : i32
    %c1_i32_13 = arith.constant 1 : i32
    %40 = arith.addi %39, %c1_i32_13 : i32
    %41 = arith.index_cast %40 : i32 to index
    %42 = memref.load %arg2[%41] : memref<108xf32, #tpu.memory_space<smem>>
    %43 = vector.extract_strided_slice %2 {offsets = [1, 1], sizes = [16, 16], strides = [1, 1]} : vector<18x18xf32> to vector<16x16xf32>
    %44 = vector.broadcast %42 : f32 to vector<16x16xf32>
    %45 = arith.mulf %44, %43 : vector<16x16xf32>
    %46 = arith.addf %37, %45 : vector<16x16xf32>
    %c0_i32_14 = arith.constant 0 : i32
    %47 = arith.addi %0, %c0_i32_14 : i32
    %c3_i32_15 = arith.constant 3 : i32
    %48 = arith.addi %47, %c3_i32_15 : i32
    %c2_i32_16 = arith.constant 2 : i32
    %49 = arith.addi %48, %c2_i32_16 : i32
    %50 = arith.index_cast %49 : i32 to index
    %51 = memref.load %arg2[%50] : memref<108xf32, #tpu.memory_space<smem>>
    %52 = vector.extract_strided_slice %2 {offsets = [1, 2], sizes = [16, 16], strides = [1, 1]} : vector<18x18xf32> to vector<16x16xf32>
    %53 = vector.broadcast %51 : f32 to vector<16x16xf32>
    %54 = arith.mulf %53, %52 : vector<16x16xf32>
    %55 = arith.addf %46, %54 : vector<16x16xf32>
    %c0_i32_17 = arith.constant 0 : i32
    %56 = arith.addi %0, %c0_i32_17 : i32
    %c6_i32 = arith.constant 6 : i32
    %57 = arith.addi %56, %c6_i32 : i32
    %c0_i32_18 = arith.constant 0 : i32
    %58 = arith.addi %57, %c0_i32_18 : i32
    %59 = arith.index_cast %58 : i32 to index
    %60 = memref.load %arg2[%59] : memref<108xf32, #tpu.memory_space<smem>>
    %61 = vector.extract_strided_slice %2 {offsets = [2, 0], sizes = [16, 16], strides = [1, 1]} : vector<18x18xf32> to vector<16x16xf32>
    %62 = vector.broadcast %60 : f32 to vector<16x16xf32>
    %63 = arith.mulf %62, %61 : vector<16x16xf32>
    %64 = arith.addf %55, %63 : vector<16x16xf32>
    %c0_i32_19 = arith.constant 0 : i32
    %65 = arith.addi %0, %c0_i32_19 : i32
    %c6_i32_20 = arith.constant 6 : i32
    %66 = arith.addi %65, %c6_i32_20 : i32
    %c1_i32_21 = arith.constant 1 : i32
    %67 = arith.addi %66, %c1_i32_21 : i32
    %68 = arith.index_cast %67 : i32 to index
    %69 = memref.load %arg2[%68] : memref<108xf32, #tpu.memory_space<smem>>
    %70 = vector.extract_strided_slice %2 {offsets = [2, 1], sizes = [16, 16], strides = [1, 1]} : vector<18x18xf32> to vector<16x16xf32>
    %71 = vector.broadcast %69 : f32 to vector<16x16xf32>
    %72 = arith.mulf %71, %70 : vector<16x16xf32>
    %73 = arith.addf %64, %72 : vector<16x16xf32>
    %c0_i32_22 = arith.constant 0 : i32
    %74 = arith.addi %0, %c0_i32_22 : i32
    %c6_i32_23 = arith.constant 6 : i32
    %75 = arith.addi %74, %c6_i32_23 : i32
    %c2_i32_24 = arith.constant 2 : i32
    %76 = arith.addi %75, %c2_i32_24 : i32
    %77 = arith.index_cast %76 : i32 to index
    %78 = memref.load %arg2[%77] : memref<108xf32, #tpu.memory_space<smem>>
    %79 = vector.extract_strided_slice %2 {offsets = [2, 2], sizes = [16, 16], strides = [1, 1]} : vector<18x18xf32> to vector<16x16xf32>
    %80 = vector.broadcast %78 : f32 to vector<16x16xf32>
    %81 = arith.mulf %80, %79 : vector<16x16xf32>
    %82 = arith.addf %73, %81 : vector<16x16xf32>
    %c0_25 = arith.constant 0 : index
    %c0_26 = arith.constant 0 : index
    %c0_27 = arith.constant 0 : index
    %c0_28 = arith.constant 0 : index
    %83 = vector.load %arg4[%c0_25, %c0_26, %c0_27, %c0_28] : memref<2x1x18x18xf32, #tpu.memory_space<vmem>>, vector<1x1x18x18xf32>
    %84 = vector.shape_cast %83 : vector<1x1x18x18xf32> to vector<18x18xf32>
    %c9_i32 = arith.constant 9 : i32
    %85 = arith.addi %0, %c9_i32 : i32
    %c0_i32_29 = arith.constant 0 : i32
    %86 = arith.addi %85, %c0_i32_29 : i32
    %c0_i32_30 = arith.constant 0 : i32
    %87 = arith.addi %86, %c0_i32_30 : i32
    %88 = arith.index_cast %87 : i32 to index
    %89 = memref.load %arg2[%88] : memref<108xf32, #tpu.memory_space<smem>>
    %90 = vector.extract_strided_slice %84 {offsets = [0, 0], sizes = [16, 16], strides = [1, 1]} : vector<18x18xf32> to vector<16x16xf32>
    %91 = vector.broadcast %89 : f32 to vector<16x16xf32>
    %92 = arith.mulf %91, %90 : vector<16x16xf32>
    %c9_i32_31 = arith.constant 9 : i32
    %93 = arith.addi %0, %c9_i32_31 : i32
    %c0_i32_32 = arith.constant 0 : i32
    %94 = arith.addi %93, %c0_i32_32 : i32
    %c1_i32_33 = arith.constant 1 : i32
    %95 = arith.addi %94, %c1_i32_33 : i32
    %96 = arith.index_cast %95 : i32 to index
    %97 = memref.load %arg2[%96] : memref<108xf32, #tpu.memory_space<smem>>
    %98 = vector.extract_strided_slice %84 {offsets = [0, 1], sizes = [16, 16], strides = [1, 1]} : vector<18x18xf32> to vector<16x16xf32>
    %99 = vector.broadcast %97 : f32 to vector<16x16xf32>
    %100 = arith.mulf %99, %98 : vector<16x16xf32>
    %101 = arith.addf %92, %100 : vector<16x16xf32>
    %c9_i32_34 = arith.constant 9 : i32
    %102 = arith.addi %0, %c9_i32_34 : i32
    %c0_i32_35 = arith.constant 0 : i32
    %103 = arith.addi %102, %c0_i32_35 : i32
    %c2_i32_36 = arith.constant 2 : i32
    %104 = arith.addi %103, %c2_i32_36 : i32
    %105 = arith.index_cast %104 : i32 to index
    %106 = memref.load %arg2[%105] : memref<108xf32, #tpu.memory_space<smem>>
    %107 = vector.extract_strided_slice %84 {offsets = [0, 2], sizes = [16, 16], strides = [1, 1]} : vector<18x18xf32> to vector<16x16xf32>
    %108 = vector.broadcast %106 : f32 to vector<16x16xf32>
    %109 = arith.mulf %108, %107 : vector<16x16xf32>
    %110 = arith.addf %101, %109 : vector<16x16xf32>
    %c9_i32_37 = arith.constant 9 : i32
    %111 = arith.addi %0, %c9_i32_37 : i32
    %c3_i32_38 = arith.constant 3 : i32
    %112 = arith.addi %111, %c3_i32_38 : i32
    %c0_i32_39 = arith.constant 0 : i32
    %113 = arith.addi %112, %c0_i32_39 : i32
    %114 = arith.index_cast %113 : i32 to index
    %115 = memref.load %arg2[%114] : memref<108xf32, #tpu.memory_space<smem>>
    %116 = vector.extract_strided_slice %84 {offsets = [1, 0], sizes = [16, 16], strides = [1, 1]} : vector<18x18xf32> to vector<16x16xf32>
    %117 = vector.broadcast %115 : f32 to vector<16x16xf32>
    %118 = arith.mulf %117, %116 : vector<16x16xf32>
    %119 = arith.addf %110, %118 : vector<16x16xf32>
    %c9_i32_40 = arith.constant 9 : i32
    %120 = arith.addi %0, %c9_i32_40 : i32
    %c3_i32_41 = arith.constant 3 : i32
    %121 = arith.addi %120, %c3_i32_41 : i32
    %c1_i32_42 = arith.constant 1 : i32
    %122 = arith.addi %121, %c1_i32_42 : i32
    %123 = arith.index_cast %122 : i32 to index
    %124 = memref.load %arg2[%123] : memref<108xf32, #tpu.memory_space<smem>>
    %125 = vector.extract_strided_slice %84 {offsets = [1, 1], sizes = [16, 16], strides = [1, 1]} : vector<18x18xf32> to vector<16x16xf32>
    %126 = vector.broadcast %124 : f32 to vector<16x16xf32>
    %127 = arith.mulf %126, %125 : vector<16x16xf32>
    %128 = arith.addf %119, %127 : vector<16x16xf32>
    %c9_i32_43 = arith.constant 9 : i32
    %129 = arith.addi %0, %c9_i32_43 : i32
    %c3_i32_44 = arith.constant 3 : i32
    %130 = arith.addi %129, %c3_i32_44 : i32
    %c2_i32_45 = arith.constant 2 : i32
    %131 = arith.addi %130, %c2_i32_45 : i32
    %132 = arith.index_cast %131 : i32 to index
    %133 = memref.load %arg2[%132] : memref<108xf32, #tpu.memory_space<smem>>
    %134 = vector.extract_strided_slice %84 {offsets = [1, 2], sizes = [16, 16], strides = [1, 1]} : vector<18x18xf32> to vector<16x16xf32>
    %135 = vector.broadcast %133 : f32 to vector<16x16xf32>
    %136 = arith.mulf %135, %134 : vector<16x16xf32>
    %137 = arith.addf %128, %136 : vector<16x16xf32>
    %c9_i32_46 = arith.constant 9 : i32
    %138 = arith.addi %0, %c9_i32_46 : i32
    %c6_i32_47 = arith.constant 6 : i32
    %139 = arith.addi %138, %c6_i32_47 : i32
    %c0_i32_48 = arith.constant 0 : i32
    %140 = arith.addi %139, %c0_i32_48 : i32
    %141 = arith.index_cast %140 : i32 to index
    %142 = memref.load %arg2[%141] : memref<108xf32, #tpu.memory_space<smem>>
    %143 = vector.extract_strided_slice %84 {offsets = [2, 0], sizes = [16, 16], strides = [1, 1]} : vector<18x18xf32> to vector<16x16xf32>
    %144 = vector.broadcast %142 : f32 to vector<16x16xf32>
    %145 = arith.mulf %144, %143 : vector<16x16xf32>
    %146 = arith.addf %137, %145 : vector<16x16xf32>
    %c9_i32_49 = arith.constant 9 : i32
    %147 = arith.addi %0, %c9_i32_49 : i32
    %c6_i32_50 = arith.constant 6 : i32
    %148 = arith.addi %147, %c6_i32_50 : i32
    %c1_i32_51 = arith.constant 1 : i32
    %149 = arith.addi %148, %c1_i32_51 : i32
    %150 = arith.index_cast %149 : i32 to index
    %151 = memref.load %arg2[%150] : memref<108xf32, #tpu.memory_space<smem>>
    %152 = vector.extract_strided_slice %84 {offsets = [2, 1], sizes = [16, 16], strides = [1, 1]} : vector<18x18xf32> to vector<16x16xf32>
    %153 = vector.broadcast %151 : f32 to vector<16x16xf32>
    %154 = arith.mulf %153, %152 : vector<16x16xf32>
    %155 = arith.addf %146, %154 : vector<16x16xf32>
    %c9_i32_52 = arith.constant 9 : i32
    %156 = arith.addi %0, %c9_i32_52 : i32
    %c6_i32_53 = arith.constant 6 : i32
    %157 = arith.addi %156, %c6_i32_53 : i32
    %c2_i32_54 = arith.constant 2 : i32
    %158 = arith.addi %157, %c2_i32_54 : i32
    %159 = arith.index_cast %158 : i32 to index
    %160 = memref.load %arg2[%159] : memref<108xf32, #tpu.memory_space<smem>>
    %161 = vector.extract_strided_slice %84 {offsets = [2, 2], sizes = [16, 16], strides = [1, 1]} : vector<18x18xf32> to vector<16x16xf32>
    %162 = vector.broadcast %160 : f32 to vector<16x16xf32>
    %163 = arith.mulf %162, %161 : vector<16x16xf32>
    %164 = arith.addf %155, %163 : vector<16x16xf32>
    %165 = arith.addf %82, %164 : vector<16x16xf32>
    %c0_55 = arith.constant 0 : index
    %c0_56 = arith.constant 0 : index
    %c0_57 = arith.constant 0 : index
    %c0_58 = arith.constant 0 : index
    %166 = vector.load %arg5[%c0_55, %c0_56, %c0_57, %c0_58] : memref<2x1x18x18xf32, #tpu.memory_space<vmem>>, vector<1x1x18x18xf32>
    %167 = vector.shape_cast %166 : vector<1x1x18x18xf32> to vector<18x18xf32>
    %c18_i32 = arith.constant 18 : i32
    %168 = arith.addi %0, %c18_i32 : i32
    %c0_i32_59 = arith.constant 0 : i32
    %169 = arith.addi %168, %c0_i32_59 : i32
    %c0_i32_60 = arith.constant 0 : i32
    %170 = arith.addi %169, %c0_i32_60 : i32
    %171 = arith.index_cast %170 : i32 to index
    %172 = memref.load %arg2[%171] : memref<108xf32, #tpu.memory_space<smem>>
    %173 = vector.extract_strided_slice %167 {offsets = [0, 0], sizes = [16, 16], strides = [1, 1]} : vector<18x18xf32> to vector<16x16xf32>
    %174 = vector.broadcast %172 : f32 to vector<16x16xf32>
    %175 = arith.mulf %174, %173 : vector<16x16xf32>
    %c18_i32_61 = arith.constant 18 : i32
    %176 = arith.addi %0, %c18_i32_61 : i32
    %c0_i32_62 = arith.constant 0 : i32
    %177 = arith.addi %176, %c0_i32_62 : i32
    %c1_i32_63 = arith.constant 1 : i32
    %178 = arith.addi %177, %c1_i32_63 : i32
    %179 = arith.index_cast %178 : i32 to index
    %180 = memref.load %arg2[%179] : memref<108xf32, #tpu.memory_space<smem>>
    %181 = vector.extract_strided_slice %167 {offsets = [0, 1], sizes = [16, 16], strides = [1, 1]} : vector<18x18xf32> to vector<16x16xf32>
    %182 = vector.broadcast %180 : f32 to vector<16x16xf32>
    %183 = arith.mulf %182, %181 : vector<16x16xf32>
    %184 = arith.addf %175, %183 : vector<16x16xf32>
    %c18_i32_64 = arith.constant 18 : i32
    %185 = arith.addi %0, %c18_i32_64 : i32
    %c0_i32_65 = arith.constant 0 : i32
    %186 = arith.addi %185, %c0_i32_65 : i32
    %c2_i32_66 = arith.constant 2 : i32
    %187 = arith.addi %186, %c2_i32_66 : i32
    %188 = arith.index_cast %187 : i32 to index
    %189 = memref.load %arg2[%188] : memref<108xf32, #tpu.memory_space<smem>>
    %190 = vector.extract_strided_slice %167 {offsets = [0, 2], sizes = [16, 16], strides = [1, 1]} : vector<18x18xf32> to vector<16x16xf32>
    %191 = vector.broadcast %189 : f32 to vector<16x16xf32>
    %192 = arith.mulf %191, %190 : vector<16x16xf32>
    %193 = arith.addf %184, %192 : vector<16x16xf32>
    %c18_i32_67 = arith.constant 18 : i32
    %194 = arith.addi %0, %c18_i32_67 : i32
    %c3_i32_68 = arith.constant 3 : i32
    %195 = arith.addi %194, %c3_i32_68 : i32
    %c0_i32_69 = arith.constant 0 : i32
    %196 = arith.addi %195, %c0_i32_69 : i32
    %197 = arith.index_cast %196 : i32 to index
    %198 = memref.load %arg2[%197] : memref<108xf32, #tpu.memory_space<smem>>
    %199 = vector.extract_strided_slice %167 {offsets = [1, 0], sizes = [16, 16], strides = [1, 1]} : vector<18x18xf32> to vector<16x16xf32>
    %200 = vector.broadcast %198 : f32 to vector<16x16xf32>
    %201 = arith.mulf %200, %199 : vector<16x16xf32>
    %202 = arith.addf %193, %201 : vector<16x16xf32>
    %c18_i32_70 = arith.constant 18 : i32
    %203 = arith.addi %0, %c18_i32_70 : i32
    %c3_i32_71 = arith.constant 3 : i32
    %204 = arith.addi %203, %c3_i32_71 : i32
    %c1_i32_72 = arith.constant 1 : i32
    %205 = arith.addi %204, %c1_i32_72 : i32
    %206 = arith.index_cast %205 : i32 to index
    %207 = memref.load %arg2[%206] : memref<108xf32, #tpu.memory_space<smem>>
    %208 = vector.extract_strided_slice %167 {offsets = [1, 1], sizes = [16, 16], strides = [1, 1]} : vector<18x18xf32> to vector<16x16xf32>
    %209 = vector.broadcast %207 : f32 to vector<16x16xf32>
    %210 = arith.mulf %209, %208 : vector<16x16xf32>
    %211 = arith.addf %202, %210 : vector<16x16xf32>
    %c18_i32_73 = arith.constant 18 : i32
    %212 = arith.addi %0, %c18_i32_73 : i32
    %c3_i32_74 = arith.constant 3 : i32
    %213 = arith.addi %212, %c3_i32_74 : i32
    %c2_i32_75 = arith.constant 2 : i32
    %214 = arith.addi %213, %c2_i32_75 : i32
    %215 = arith.index_cast %214 : i32 to index
    %216 = memref.load %arg2[%215] : memref<108xf32, #tpu.memory_space<smem>>
    %217 = vector.extract_strided_slice %167 {offsets = [1, 2], sizes = [16, 16], strides = [1, 1]} : vector<18x18xf32> to vector<16x16xf32>
    %218 = vector.broadcast %216 : f32 to vector<16x16xf32>
    %219 = arith.mulf %218, %217 : vector<16x16xf32>
    %220 = arith.addf %211, %219 : vector<16x16xf32>
    %c18_i32_76 = arith.constant 18 : i32
    %221 = arith.addi %0, %c18_i32_76 : i32
    %c6_i32_77 = arith.constant 6 : i32
    %222 = arith.addi %221, %c6_i32_77 : i32
    %c0_i32_78 = arith.constant 0 : i32
    %223 = arith.addi %222, %c0_i32_78 : i32
    %224 = arith.index_cast %223 : i32 to index
    %225 = memref.load %arg2[%224] : memref<108xf32, #tpu.memory_space<smem>>
    %226 = vector.extract_strided_slice %167 {offsets = [2, 0], sizes = [16, 16], strides = [1, 1]} : vector<18x18xf32> to vector<16x16xf32>
    %227 = vector.broadcast %225 : f32 to vector<16x16xf32>
    %228 = arith.mulf %227, %226 : vector<16x16xf32>
    %229 = arith.addf %220, %228 : vector<16x16xf32>
    %c18_i32_79 = arith.constant 18 : i32
    %230 = arith.addi %0, %c18_i32_79 : i32
    %c6_i32_80 = arith.constant 6 : i32
    %231 = arith.addi %230, %c6_i32_80 : i32
    %c1_i32_81 = arith.constant 1 : i32
    %232 = arith.addi %231, %c1_i32_81 : i32
    %233 = arith.index_cast %232 : i32 to index
    %234 = memref.load %arg2[%233] : memref<108xf32, #tpu.memory_space<smem>>
    %235 = vector.extract_strided_slice %167 {offsets = [2, 1], sizes = [16, 16], strides = [1, 1]} : vector<18x18xf32> to vector<16x16xf32>
    %236 = vector.broadcast %234 : f32 to vector<16x16xf32>
    %237 = arith.mulf %236, %235 : vector<16x16xf32>
    %238 = arith.addf %229, %237 : vector<16x16xf32>
    %c18_i32_82 = arith.constant 18 : i32
    %239 = arith.addi %0, %c18_i32_82 : i32
    %c6_i32_83 = arith.constant 6 : i32
    %240 = arith.addi %239, %c6_i32_83 : i32
    %c2_i32_84 = arith.constant 2 : i32
    %241 = arith.addi %240, %c2_i32_84 : i32
    %242 = arith.index_cast %241 : i32 to index
    %243 = memref.load %arg2[%242] : memref<108xf32, #tpu.memory_space<smem>>
    %244 = vector.extract_strided_slice %167 {offsets = [2, 2], sizes = [16, 16], strides = [1, 1]} : vector<18x18xf32> to vector<16x16xf32>
    %245 = vector.broadcast %243 : f32 to vector<16x16xf32>
    %246 = arith.mulf %245, %244 : vector<16x16xf32>
    %247 = arith.addf %238, %246 : vector<16x16xf32>
    %248 = arith.addf %165, %247 : vector<16x16xf32>
    %c0_85 = arith.constant 0 : index
    %c0_86 = arith.constant 0 : index
    %c0_87 = arith.constant 0 : index
    %c0_88 = arith.constant 0 : index
    %249 = vector.load %arg6[%c0_85, %c0_86, %c0_87, %c0_88] : memref<2x1x16x16xf32, #tpu.memory_space<vmem>>, vector<1x1x16x16xf32>
    %250 = vector.shape_cast %249 : vector<1x1x16x16xf32> to vector<16x16xf32>
    %251 = vector.shape_cast %248 : vector<16x16xf32> to vector<1x1x16x16xf32>
    tpu.vector_store %arg6[%c0_85, %c0_86, %c0_87, %c0_88], %251 {strides = array<i32>} : memref<2x1x16x16xf32, #tpu.memory_space<vmem>>, vector<1x1x16x16xf32>,
    %c1 = arith.constant 1 : index
    %c0_89 = arith.constant 0 : index
    %c0_90 = arith.constant 0 : index
    %c0_91 = arith.constant 0 : index
    %252 = vector.load %arg3[%c1, %c0_89, %c0_90, %c0_91] : memref<2x1x18x18xf32, #tpu.memory_space<vmem>>, vector<1x1x18x18xf32>
    %253 = vector.shape_cast %252 : vector<1x1x18x18xf32> to vector<18x18xf32>
    %c0_i32_92 = arith.constant 0 : i32
    %254 = arith.addi %0, %c0_i32_92 : i32
    %c0_i32_93 = arith.constant 0 : i32
    %255 = arith.addi %254, %c0_i32_93 : i32
    %c0_i32_94 = arith.constant 0 : i32
    %256 = arith.addi %255, %c0_i32_94 : i32
    %257 = arith.index_cast %256 : i32 to index
    %258 = memref.load %arg2[%257] : memref<108xf32, #tpu.memory_space<smem>>
    %259 = vector.extract_strided_slice %253 {offsets = [0, 0], sizes = [16, 16], strides = [1, 1]} : vector<18x18xf32> to vector<16x16xf32>
    %260 = vector.broadcast %258 : f32 to vector<16x16xf32>
    %261 = arith.mulf %260, %259 : vector<16x16xf32>
    %c0_i32_95 = arith.constant 0 : i32
    %262 = arith.addi %0, %c0_i32_95 : i32
    %c0_i32_96 = arith.constant 0 : i32
    %263 = arith.addi %262, %c0_i32_96 : i32
    %c1_i32_97 = arith.constant 1 : i32
    %264 = arith.addi %263, %c1_i32_97 : i32
    %265 = arith.index_cast %264 : i32 to index
    %266 = memref.load %arg2[%265] : memref<108xf32, #tpu.memory_space<smem>>
    %267 = vector.extract_strided_slice %253 {offsets = [0, 1], sizes = [16, 16], strides = [1, 1]} : vector<18x18xf32> to vector<16x16xf32>
    %268 = vector.broadcast %266 : f32 to vector<16x16xf32>
    %269 = arith.mulf %268, %267 : vector<16x16xf32>
    %270 = arith.addf %261, %269 : vector<16x16xf32>
    %c0_i32_98 = arith.constant 0 : i32
    %271 = arith.addi %0, %c0_i32_98 : i32
    %c0_i32_99 = arith.constant 0 : i32
    %272 = arith.addi %271, %c0_i32_99 : i32
    %c2_i32_100 = arith.constant 2 : i32
    %273 = arith.addi %272, %c2_i32_100 : i32
    %274 = arith.index_cast %273 : i32 to index
    %275 = memref.load %arg2[%274] : memref<108xf32, #tpu.memory_space<smem>>
    %276 = vector.extract_strided_slice %253 {offsets = [0, 2], sizes = [16, 16], strides = [1, 1]} : vector<18x18xf32> to vector<16x16xf32>
    %277 = vector.broadcast %275 : f32 to vector<16x16xf32>
    %278 = arith.mulf %277, %276 : vector<16x16xf32>
    %279 = arith.addf %270, %278 : vector<16x16xf32>
    %c0_i32_101 = arith.constant 0 : i32
    %280 = arith.addi %0, %c0_i32_101 : i32
    %c3_i32_102 = arith.constant 3 : i32
    %281 = arith.addi %280, %c3_i32_102 : i32
    %c0_i32_103 = arith.constant 0 : i32
    %282 = arith.addi %281, %c0_i32_103 : i32
    %283 = arith.index_cast %282 : i32 to index
    %284 = memref.load %arg2[%283] : memref<108xf32, #tpu.memory_space<smem>>
    %285 = vector.extract_strided_slice %253 {offsets = [1, 0], sizes = [16, 16], strides = [1, 1]} : vector<18x18xf32> to vector<16x16xf32>
    %286 = vector.broadcast %284 : f32 to vector<16x16xf32>
    %287 = arith.mulf %286, %285 : vector<16x16xf32>
    %288 = arith.addf %279, %287 : vector<16x16xf32>
    %c0_i32_104 = arith.constant 0 : i32
    %289 = arith.addi %0, %c0_i32_104 : i32
    %c3_i32_105 = arith.constant 3 : i32
    %290 = arith.addi %289, %c3_i32_105 : i32
    %c1_i32_106 = arith.constant 1 : i32
    %291 = arith.addi %290, %c1_i32_106 : i32
    %292 = arith.index_cast %291 : i32 to index
    %293 = memref.load %arg2[%292] : memref<108xf32, #tpu.memory_space<smem>>
    %294 = vector.extract_strided_slice %253 {offsets = [1, 1], sizes = [16, 16], strides = [1, 1]} : vector<18x18xf32> to vector<16x16xf32>
    %295 = vector.broadcast %293 : f32 to vector<16x16xf32>
    %296 = arith.mulf %295, %294 : vector<16x16xf32>
    %297 = arith.addf %288, %296 : vector<16x16xf32>
    %c0_i32_107 = arith.constant 0 : i32
    %298 = arith.addi %0, %c0_i32_107 : i32
    %c3_i32_108 = arith.constant 3 : i32
    %299 = arith.addi %298, %c3_i32_108 : i32
    %c2_i32_109 = arith.constant 2 : i32
    %300 = arith.addi %299, %c2_i32_109 : i32
    %301 = arith.index_cast %300 : i32 to index
    %302 = memref.load %arg2[%301] : memref<108xf32, #tpu.memory_space<smem>>
    %303 = vector.extract_strided_slice %253 {offsets = [1, 2], sizes = [16, 16], strides = [1, 1]} : vector<18x18xf32> to vector<16x16xf32>
    %304 = vector.broadcast %302 : f32 to vector<16x16xf32>
    %305 = arith.mulf %304, %303 : vector<16x16xf32>
    %306 = arith.addf %297, %305 : vector<16x16xf32>
    %c0_i32_110 = arith.constant 0 : i32
    %307 = arith.addi %0, %c0_i32_110 : i32
    %c6_i32_111 = arith.constant 6 : i32
    %308 = arith.addi %307, %c6_i32_111 : i32
    %c0_i32_112 = arith.constant 0 : i32
    %309 = arith.addi %308, %c0_i32_112 : i32
    %310 = arith.index_cast %309 : i32 to index
    %311 = memref.load %arg2[%310] : memref<108xf32, #tpu.memory_space<smem>>
    %312 = vector.extract_strided_slice %253 {offsets = [2, 0], sizes = [16, 16], strides = [1, 1]} : vector<18x18xf32> to vector<16x16xf32>
    %313 = vector.broadcast %311 : f32 to vector<16x16xf32>
    %314 = arith.mulf %313, %312 : vector<16x16xf32>
    %315 = arith.addf %306, %314 : vector<16x16xf32>
    %c0_i32_113 = arith.constant 0 : i32
    %316 = arith.addi %0, %c0_i32_113 : i32
    %c6_i32_114 = arith.constant 6 : i32
    %317 = arith.addi %316, %c6_i32_114 : i32
    %c1_i32_115 = arith.constant 1 : i32
    %318 = arith.addi %317, %c1_i32_115 : i32
    %319 = arith.index_cast %318 : i32 to index
    %320 = memref.load %arg2[%319] : memref<108xf32, #tpu.memory_space<smem>>
    %321 = vector.extract_strided_slice %253 {offsets = [2, 1], sizes = [16, 16], strides = [1, 1]} : vector<18x18xf32> to vector<16x16xf32>
    %322 = vector.broadcast %320 : f32 to vector<16x16xf32>
    %323 = arith.mulf %322, %321 : vector<16x16xf32>
    %324 = arith.addf %315, %323 : vector<16x16xf32>
    %c0_i32_116 = arith.constant 0 : i32
    %325 = arith.addi %0, %c0_i32_116 : i32
    %c6_i32_117 = arith.constant 6 : i32
    %326 = arith.addi %325, %c6_i32_117 : i32
    %c2_i32_118 = arith.constant 2 : i32
    %327 = arith.addi %326, %c2_i32_118 : i32
    %328 = arith.index_cast %327 : i32 to index
    %329 = memref.load %arg2[%328] : memref<108xf32, #tpu.memory_space<smem>>
    %330 = vector.extract_strided_slice %253 {offsets = [2, 2], sizes = [16, 16], strides = [1, 1]} : vector<18x18xf32> to vector<16x16xf32>
    %331 = vector.broadcast %329 : f32 to vector<16x16xf32>
    %332 = arith.mulf %331, %330 : vector<16x16xf32>
    %333 = arith.addf %324, %332 : vector<16x16xf32>
    %c1_119 = arith.constant 1 : index
    %c0_120 = arith.constant 0 : index
    %c0_121 = arith.constant 0 : index
    %c0_122 = arith.constant 0 : index
    %334 = vector.load %arg4[%c1_119, %c0_120, %c0_121, %c0_122] : memref<2x1x18x18xf32, #tpu.memory_space<vmem>>, vector<1x1x18x18xf32>
    %335 = vector.shape_cast %334 : vector<1x1x18x18xf32> to vector<18x18xf32>
    %c9_i32_123 = arith.constant 9 : i32
    %336 = arith.addi %0, %c9_i32_123 : i32
    %c0_i32_124 = arith.constant 0 : i32
    %337 = arith.addi %336, %c0_i32_124 : i32
    %c0_i32_125 = arith.constant 0 : i32
    %338 = arith.addi %337, %c0_i32_125 : i32
    %339 = arith.index_cast %338 : i32 to index
    %340 = memref.load %arg2[%339] : memref<108xf32, #tpu.memory_space<smem>>
    %341 = vector.extract_strided_slice %335 {offsets = [0, 0], sizes = [16, 16], strides = [1, 1]} : vector<18x18xf32> to vector<16x16xf32>
    %342 = vector.broadcast %340 : f32 to vector<16x16xf32>
    %343 = arith.mulf %342, %341 : vector<16x16xf32>
    %c9_i32_126 = arith.constant 9 : i32
    %344 = arith.addi %0, %c9_i32_126 : i32
    %c0_i32_127 = arith.constant 0 : i32
    %345 = arith.addi %344, %c0_i32_127 : i32
    %c1_i32_128 = arith.constant 1 : i32
    %346 = arith.addi %345, %c1_i32_128 : i32
    %347 = arith.index_cast %346 : i32 to index
    %348 = memref.load %arg2[%347] : memref<108xf32, #tpu.memory_space<smem>>
    %349 = vector.extract_strided_slice %335 {offsets = [0, 1], sizes = [16, 16], strides = [1, 1]} : vector<18x18xf32> to vector<16x16xf32>
    %350 = vector.broadcast %348 : f32 to vector<16x16xf32>
    %351 = arith.mulf %350, %349 : vector<16x16xf32>
    %352 = arith.addf %343, %351 : vector<16x16xf32>
    %c9_i32_129 = arith.constant 9 : i32
    %353 = arith.addi %0, %c9_i32_129 : i32
    %c0_i32_130 = arith.constant 0 : i32
    %354 = arith.addi %353, %c0_i32_130 : i32
    %c2_i32_131 = arith.constant 2 : i32
    %355 = arith.addi %354, %c2_i32_131 : i32
    %356 = arith.index_cast %355 : i32 to index
    %357 = memref.load %arg2[%356] : memref<108xf32, #tpu.memory_space<smem>>
    %358 = vector.extract_strided_slice %335 {offsets = [0, 2], sizes = [16, 16], strides = [1, 1]} : vector<18x18xf32> to vector<16x16xf32>
    %359 = vector.broadcast %357 : f32 to vector<16x16xf32>
    %360 = arith.mulf %359, %358 : vector<16x16xf32>
    %361 = arith.addf %352, %360 : vector<16x16xf32>
    %c9_i32_132 = arith.constant 9 : i32
    %362 = arith.addi %0, %c9_i32_132 : i32
    %c3_i32_133 = arith.constant 3 : i32
    %363 = arith.addi %362, %c3_i32_133 : i32
    %c0_i32_134 = arith.constant 0 : i32
    %364 = arith.addi %363, %c0_i32_134 : i32
    %365 = arith.index_cast %364 : i32 to index
    %366 = memref.load %arg2[%365] : memref<108xf32, #tpu.memory_space<smem>>
    %367 = vector.extract_strided_slice %335 {offsets = [1, 0], sizes = [16, 16], strides = [1, 1]} : vector<18x18xf32> to vector<16x16xf32>
    %368 = vector.broadcast %366 : f32 to vector<16x16xf32>
    %369 = arith.mulf %368, %367 : vector<16x16xf32>
    %370 = arith.addf %361, %369 : vector<16x16xf32>
    %c9_i32_135 = arith.constant 9 : i32
    %371 = arith.addi %0, %c9_i32_135 : i32
    %c3_i32_136 = arith.constant 3 : i32
    %372 = arith.addi %371, %c3_i32_136 : i32
    %c1_i32_137 = arith.constant 1 : i32
    %373 = arith.addi %372, %c1_i32_137 : i32
    %374 = arith.index_cast %373 : i32 to index
    %375 = memref.load %arg2[%374] : memref<108xf32, #tpu.memory_space<smem>>
    %376 = vector.extract_strided_slice %335 {offsets = [1, 1], sizes = [16, 16], strides = [1, 1]} : vector<18x18xf32> to vector<16x16xf32>
    %377 = vector.broadcast %375 : f32 to vector<16x16xf32>
    %378 = arith.mulf %377, %376 : vector<16x16xf32>
    %379 = arith.addf %370, %378 : vector<16x16xf32>
    %c9_i32_138 = arith.constant 9 : i32
    %380 = arith.addi %0, %c9_i32_138 : i32
    %c3_i32_139 = arith.constant 3 : i32
    %381 = arith.addi %380, %c3_i32_139 : i32
    %c2_i32_140 = arith.constant 2 : i32
    %382 = arith.addi %381, %c2_i32_140 : i32
    %383 = arith.index_cast %382 : i32 to index
    %384 = memref.load %arg2[%383] : memref<108xf32, #tpu.memory_space<smem>>
    %385 = vector.extract_strided_slice %335 {offsets = [1, 2], sizes = [16, 16], strides = [1, 1]} : vector<18x18xf32> to vector<16x16xf32>
    %386 = vector.broadcast %384 : f32 to vector<16x16xf32>
    %387 = arith.mulf %386, %385 : vector<16x16xf32>
    %388 = arith.addf %379, %387 : vector<16x16xf32>
    %c9_i32_141 = arith.constant 9 : i32
    %389 = arith.addi %0, %c9_i32_141 : i32
    %c6_i32_142 = arith.constant 6 : i32
    %390 = arith.addi %389, %c6_i32_142 : i32
    %c0_i32_143 = arith.constant 0 : i32
    %391 = arith.addi %390, %c0_i32_143 : i32
    %392 = arith.index_cast %391 : i32 to index
    %393 = memref.load %arg2[%392] : memref<108xf32, #tpu.memory_space<smem>>
    %394 = vector.extract_strided_slice %335 {offsets = [2, 0], sizes = [16, 16], strides = [1, 1]} : vector<18x18xf32> to vector<16x16xf32>
    %395 = vector.broadcast %393 : f32 to vector<16x16xf32>
    %396 = arith.mulf %395, %394 : vector<16x16xf32>
    %397 = arith.addf %388, %396 : vector<16x16xf32>
    %c9_i32_144 = arith.constant 9 : i32
    %398 = arith.addi %0, %c9_i32_144 : i32
    %c6_i32_145 = arith.constant 6 : i32
    %399 = arith.addi %398, %c6_i32_145 : i32
    %c1_i32_146 = arith.constant 1 : i32
    %400 = arith.addi %399, %c1_i32_146 : i32
    %401 = arith.index_cast %400 : i32 to index
    %402 = memref.load %arg2[%401] : memref<108xf32, #tpu.memory_space<smem>>
    %403 = vector.extract_strided_slice %335 {offsets = [2, 1], sizes = [16, 16], strides = [1, 1]} : vector<18x18xf32> to vector<16x16xf32>
    %404 = vector.broadcast %402 : f32 to vector<16x16xf32>
    %405 = arith.mulf %404, %403 : vector<16x16xf32>
    %406 = arith.addf %397, %405 : vector<16x16xf32>
    %c9_i32_147 = arith.constant 9 : i32
    %407 = arith.addi %0, %c9_i32_147 : i32
    %c6_i32_148 = arith.constant 6 : i32
    %408 = arith.addi %407, %c6_i32_148 : i32
    %c2_i32_149 = arith.constant 2 : i32
    %409 = arith.addi %408, %c2_i32_149 : i32
    %410 = arith.index_cast %409 : i32 to index
    %411 = memref.load %arg2[%410] : memref<108xf32, #tpu.memory_space<smem>>
    %412 = vector.extract_strided_slice %335 {offsets = [2, 2], sizes = [16, 16], strides = [1, 1]} : vector<18x18xf32> to vector<16x16xf32>
    %413 = vector.broadcast %411 : f32 to vector<16x16xf32>
    %414 = arith.mulf %413, %412 : vector<16x16xf32>
    %415 = arith.addf %406, %414 : vector<16x16xf32>
    %416 = arith.addf %333, %415 : vector<16x16xf32>
    %c1_150 = arith.constant 1 : index
    %c0_151 = arith.constant 0 : index
    %c0_152 = arith.constant 0 : index
    %c0_153 = arith.constant 0 : index
    %417 = vector.load %arg5[%c1_150, %c0_151, %c0_152, %c0_153] : memref<2x1x18x18xf32, #tpu.memory_space<vmem>>, vector<1x1x18x18xf32>
    %418 = vector.shape_cast %417 : vector<1x1x18x18xf32> to vector<18x18xf32>
    %c18_i32_154 = arith.constant 18 : i32
    %419 = arith.addi %0, %c18_i32_154 : i32
    %c0_i32_155 = arith.constant 0 : i32
    %420 = arith.addi %419, %c0_i32_155 : i32
    %c0_i32_156 = arith.constant 0 : i32
    %421 = arith.addi %420, %c0_i32_156 : i32
    %422 = arith.index_cast %421 : i32 to index
    %423 = memref.load %arg2[%422] : memref<108xf32, #tpu.memory_space<smem>>
    %424 = vector.extract_strided_slice %418 {offsets = [0, 0], sizes = [16, 16], strides = [1, 1]} : vector<18x18xf32> to vector<16x16xf32>
    %425 = vector.broadcast %423 : f32 to vector<16x16xf32>
    %426 = arith.mulf %425, %424 : vector<16x16xf32>
    %c18_i32_157 = arith.constant 18 : i32
    %427 = arith.addi %0, %c18_i32_157 : i32
    %c0_i32_158 = arith.constant 0 : i32
    %428 = arith.addi %427, %c0_i32_158 : i32
    %c1_i32_159 = arith.constant 1 : i32
    %429 = arith.addi %428, %c1_i32_159 : i32
    %430 = arith.index_cast %429 : i32 to index
    %431 = memref.load %arg2[%430] : memref<108xf32, #tpu.memory_space<smem>>
    %432 = vector.extract_strided_slice %418 {offsets = [0, 1], sizes = [16, 16], strides = [1, 1]} : vector<18x18xf32> to vector<16x16xf32>
    %433 = vector.broadcast %431 : f32 to vector<16x16xf32>
    %434 = arith.mulf %433, %432 : vector<16x16xf32>
    %435 = arith.addf %426, %434 : vector<16x16xf32>
    %c18_i32_160 = arith.constant 18 : i32
    %436 = arith.addi %0, %c18_i32_160 : i32
    %c0_i32_161 = arith.constant 0 : i32
    %437 = arith.addi %436, %c0_i32_161 : i32
    %c2_i32_162 = arith.constant 2 : i32
    %438 = arith.addi %437, %c2_i32_162 : i32
    %439 = arith.index_cast %438 : i32 to index
    %440 = memref.load %arg2[%439] : memref<108xf32, #tpu.memory_space<smem>>
    %441 = vector.extract_strided_slice %418 {offsets = [0, 2], sizes = [16, 16], strides = [1, 1]} : vector<18x18xf32> to vector<16x16xf32>
    %442 = vector.broadcast %440 : f32 to vector<16x16xf32>
    %443 = arith.mulf %442, %441 : vector<16x16xf32>
    %444 = arith.addf %435, %443 : vector<16x16xf32>
    %c18_i32_163 = arith.constant 18 : i32
    %445 = arith.addi %0, %c18_i32_163 : i32
    %c3_i32_164 = arith.constant 3 : i32
    %446 = arith.addi %445, %c3_i32_164 : i32
    %c0_i32_165 = arith.constant 0 : i32
    %447 = arith.addi %446, %c0_i32_165 : i32
    %448 = arith.index_cast %447 : i32 to index
    %449 = memref.load %arg2[%448] : memref<108xf32, #tpu.memory_space<smem>>
    %450 = vector.extract_strided_slice %418 {offsets = [1, 0], sizes = [16, 16], strides = [1, 1]} : vector<18x18xf32> to vector<16x16xf32>
    %451 = vector.broadcast %449 : f32 to vector<16x16xf32>
    %452 = arith.mulf %451, %450 : vector<16x16xf32>
    %453 = arith.addf %444, %452 : vector<16x16xf32>
    %c18_i32_166 = arith.constant 18 : i32
    %454 = arith.addi %0, %c18_i32_166 : i32
    %c3_i32_167 = arith.constant 3 : i32
    %455 = arith.addi %454, %c3_i32_167 : i32
    %c1_i32_168 = arith.constant 1 : i32
    %456 = arith.addi %455, %c1_i32_168 : i32
    %457 = arith.index_cast %456 : i32 to index
    %458 = memref.load %arg2[%457] : memref<108xf32, #tpu.memory_space<smem>>
    %459 = vector.extract_strided_slice %418 {offsets = [1, 1], sizes = [16, 16], strides = [1, 1]} : vector<18x18xf32> to vector<16x16xf32>
    %460 = vector.broadcast %458 : f32 to vector<16x16xf32>
    %461 = arith.mulf %460, %459 : vector<16x16xf32>
    %462 = arith.addf %453, %461 : vector<16x16xf32>
    %c18_i32_169 = arith.constant 18 : i32
    %463 = arith.addi %0, %c18_i32_169 : i32
    %c3_i32_170 = arith.constant 3 : i32
    %464 = arith.addi %463, %c3_i32_170 : i32
    %c2_i32_171 = arith.constant 2 : i32
    %465 = arith.addi %464, %c2_i32_171 : i32
    %466 = arith.index_cast %465 : i32 to index
    %467 = memref.load %arg2[%466] : memref<108xf32, #tpu.memory_space<smem>>
    %468 = vector.extract_strided_slice %418 {offsets = [1, 2], sizes = [16, 16], strides = [1, 1]} : vector<18x18xf32> to vector<16x16xf32>
    %469 = vector.broadcast %467 : f32 to vector<16x16xf32>
    %470 = arith.mulf %469, %468 : vector<16x16xf32>
    %471 = arith.addf %462, %470 : vector<16x16xf32>
    %c18_i32_172 = arith.constant 18 : i32
    %472 = arith.addi %0, %c18_i32_172 : i32
    %c6_i32_173 = arith.constant 6 : i32
    %473 = arith.addi %472, %c6_i32_173 : i32
    %c0_i32_174 = arith.constant 0 : i32
    %474 = arith.addi %473, %c0_i32_174 : i32
    %475 = arith.index_cast %474 : i32 to index
    %476 = memref.load %arg2[%475] : memref<108xf32, #tpu.memory_space<smem>>
    %477 = vector.extract_strided_slice %418 {offsets = [2, 0], sizes = [16, 16], strides = [1, 1]} : vector<18x18xf32> to vector<16x16xf32>
    %478 = vector.broadcast %476 : f32 to vector<16x16xf32>
    %479 = arith.mulf %478, %477 : vector<16x16xf32>
    %480 = arith.addf %471, %479 : vector<16x16xf32>
    %c18_i32_175 = arith.constant 18 : i32
    %481 = arith.addi %0, %c18_i32_175 : i32
    %c6_i32_176 = arith.constant 6 : i32
    %482 = arith.addi %481, %c6_i32_176 : i32
    %c1_i32_177 = arith.constant 1 : i32
    %483 = arith.addi %482, %c1_i32_177 : i32
    %484 = arith.index_cast %483 : i32 to index
    %485 = memref.load %arg2[%484] : memref<108xf32, #tpu.memory_space<smem>>
    %486 = vector.extract_strided_slice %418 {offsets = [2, 1], sizes = [16, 16], strides = [1, 1]} : vector<18x18xf32> to vector<16x16xf32>
    %487 = vector.broadcast %485 : f32 to vector<16x16xf32>
    %488 = arith.mulf %487, %486 : vector<16x16xf32>
    %489 = arith.addf %480, %488 : vector<16x16xf32>
    %c18_i32_178 = arith.constant 18 : i32
    %490 = arith.addi %0, %c18_i32_178 : i32
    %c6_i32_179 = arith.constant 6 : i32
    %491 = arith.addi %490, %c6_i32_179 : i32
    %c2_i32_180 = arith.constant 2 : i32
    %492 = arith.addi %491, %c2_i32_180 : i32
    %493 = arith.index_cast %492 : i32 to index
    %494 = memref.load %arg2[%493] : memref<108xf32, #tpu.memory_space<smem>>
    %495 = vector.extract_strided_slice %418 {offsets = [2, 2], sizes = [16, 16], strides = [1, 1]} : vector<18x18xf32> to vector<16x16xf32>
    %496 = vector.broadcast %494 : f32 to vector<16x16xf32>
    %497 = arith.mulf %496, %495 : vector<16x16xf32>
    %498 = arith.addf %489, %497 : vector<16x16xf32>
    %499 = arith.addf %416, %498 : vector<16x16xf32>
    %c1_181 = arith.constant 1 : index
    %c0_182 = arith.constant 0 : index
    %c0_183 = arith.constant 0 : index
    %c0_184 = arith.constant 0 : index
    %500 = vector.load %arg6[%c1_181, %c0_182, %c0_183, %c0_184] : memref<2x1x16x16xf32, #tpu.memory_space<vmem>>, vector<1x1x16x16xf32>
    %501 = vector.shape_cast %500 : vector<1x1x16x16xf32> to vector<16x16xf32>
    %502 = vector.shape_cast %499 : vector<16x16xf32> to vector<1x1x16x16xf32>
    tpu.vector_store %arg6[%c1_181, %c0_182, %c0_183, %c0_184], %502 {strides = array<i32>} : memref<2x1x16x16xf32, #tpu.memory_space<vmem>>, vector<1x1x16x16xf32>,
    return
  }
  func.func @transform_0(%arg0: i32, %arg1: i32) -> i32 {
    %c0_i32 = arith.constant 0 : i32
    %c0_i32_0 = arith.constant 0 : i32
    return %c0_i32 : i32
  }
  func.func @transform_1(%arg0: i32, %arg1: i32) -> (i32, i32, i32, i32) {
    %c0_i32 = arith.constant 0 : i32
    %c0_i32_0 = arith.constant 0 : i32
    %c0_i32_1 = arith.constant 0 : i32
    return %arg1, %arg0, %c0_i32, %c0_i32_0 : i32, i32, i32, i32
  }
  func.func @transform_2(%arg0: i32, %arg1: i32) -> (i32, i32, i32, i32) {
    %c0_i32 = arith.constant 0 : i32
    %c0_i32_0 = arith.constant 0 : i32
    %c0_i32_1 = arith.constant 0 : i32
    return %arg1, %arg0, %c0_i32, %c0_i32_0 : i32, i32, i32, i32
  }
  func.func @transform_3(%arg0: i32, %arg1: i32) -> (i32, i32, i32, i32) {
    %c0_i32 = arith.constant 0 : i32
    %c0_i32_0 = arith.constant 0 : i32
    %c0_i32_1 = arith.constant 0 : i32
    return %arg1, %arg0, %c0_i32, %c0_i32_0 : i32, i32, i32, i32
  }
  func.func @transform_4(%arg0: i32, %arg1: i32) -> (i32, i32, i32, i32) {
    %c0_i32 = arith.constant 0 : i32
    %c0_i32_0 = arith.constant 0 : i32
    %c0_i32_1 = arith.constant 0 : i32
    return %arg1, %arg0, %c0_i32, %c0_i32_0 : i32, i32, i32, i32
  }
}

</mosaic_0001>

<llo_original>
// kernel: tpu_custom_call.1
$region0: #{tpu_custom_call.1}
  #allocation0 [shape = 'u32[]', space=smem, size = 0x4, offset = 0x4, fixed_abs, tag = 'smem constant byte address 0x4 - core index']
  #allocation1 [shape = 'u32[72,128]{1,0:T(1,128)}', space=vmem, size = 0x9000, scoped, tag = 'internal scratch']
  #allocation9 [shape = 's32[]', space=sflag, size = 0x4, offset = 0, fixed_abs, tag = 'sflag constant byte address 0x0 - dummy sync flag']
  %s0 = inlined_call_operand.vmem [shape: f32[108], index: 0, kind: input, shape index: {}]
  %s1 = inlined_call_operand.vmem [shape: f32[2,4,18,18], index: 1, kind: input, shape index: {}]
  %s2 = inlined_call_operand.vmem [shape: f32[2,4,18,18], index: 2, kind: input, shape index: {}]
  %s3 = inlined_call_operand.vmem [shape: f32[2,4,18,18], index: 3, kind: input, shape index: {}]
  %s4 = inlined_call_operand.hbm [shape: f32[2,4,16,16], index: 4, kind: output, shape index: {}]
  %s5 = sld [smem:[#allocation0]]
  $region167: #{tpu_custom_call.1} parent=0
    _
  %s7 = ssub.s32 1, %s5
  %s8 = scalar_select 0, %s7, %s5
  $region1: #{tpu_custom_call.1} parent=0
    #allocation2 [shape = 'u8[512]{0}', space=smem, size = 0x200, scoped, tag = 'input window, operand 0, single buffered']
    #allocation3 [shape = 's32[2]{0}', space=sflag, size = 0x8, scoped, tag = 'scoped memory for tpu_custom_call.1']
    #allocation4 [shape = 's32[2]{0}', space=sflag, size = 0x8, scoped, tag = 'scoped memory for tpu_custom_call.1']
    #allocation5 [shape = 'u8[49152]{0}', space=vmem, size = 0xc000, scoped, tag = 'input window, operand 1']
    #allocation6 [shape = 'u8[49152]{0}', space=vmem, size = 0xc000, scoped, tag = 'input window, operand 2']
    #allocation7 [shape = 'u8[49152]{0}', space=vmem, size = 0xc000, scoped, tag = 'input window, operand 3']
    #allocation8 [shape = 'u8[32768]{0}', space=vmem, size = 0x8000, scoped, tag = 'output window, operand 0']
    %9 = vsyncpa [#allocation4], 0
    %10 = vsyncpa [#allocation3], 0
    %s11 = scalar_lea.sflag [#allocation3], 1
    %12 = vsyncpa %s11, 0
    loop: start=0, step=1, limit=6
    $region2: #{tpu_custom_call.1} parent=1 // loop_pre_header
      _
    $region3: #{tpu_custom_call.1} parent=1 // loop_header
      %s14 = sphi 0, %s18
      %p15 = scmp.ge.s32.totalorder %s14, 6
      %s21 = sphi 0, %s33
      %s22 = sphi 0, %s29
      %s23 = sphi 0, %s21
      %s24 = sphi 0, %s22
      %s25 = sphi 0, %s23
      %s26 = sphi 0, %s24
      %s34 = sphi 0, %s34
      %s36 = sphi 0, %s34
      %s37 = sphi 0, %s36
      %s51 = sphi 0, %s37
      %s59 = sphi 0, %s61
      %s62 = sphi 0, %s59
      %s63 = sphi 0, %s62
      %s79 = sphi 0, %s63
      %s87 = sphi 0, %s89
      %s90 = sphi 0, %s87
      %s91 = sphi 0, %s90
      %s107 = sphi 0, %s91
      %s115 = sphi 0, %s117
      %s118 = sphi 0, %s115
      %s119 = sphi 0, %s118
      %s135 = sphi 0, %s119
      %s143 = sphi 0, %s145
      %s146 = sphi 0, %s143
      %s147 = sphi 0, %s146
      %s163 = sphi 0, %s147
    $region4: #{tpu_custom_call.1} parent=1 // loop_header_branch
      %17 = sbr.rel (%p15) target = $region8
    $region5: #{tpu_custom_call.1} parent=1 // loop_body
      %s19 = ssub.s32 %s14, 1
      %s20 = ssub.s32 %s14, 2
      %s27 = sadd.s32 1, %s22
      %p28 = scmp.ge.s32.totalorder %s27, 1
      %s29 = scalar_select %p28, 0, %s27
      %s30 = sadd.s32 1, %s21
      %s31 = scalar_select %p28, %s30, %s21
      %p32 = scmp.ge.s32.totalorder %s31, 4
      %s33 = scalar_select %p32, 0, %s31
      %s35 = sadd.s32 %s34, 1
      %p38 = scmp.eq.s32.totalorder %s14, 3
      %p39 = scmp.ne.s32.totalorder %s34, %s36
      %p40 = scmp.eq.s32.totalorder %s14, 0
      %p41 = por %p39, %p40
      %p42 = scmp.ne.s32.totalorder %s34, %s36
      %p43 = scmp.eq.s32.totalorder %s19, 3
      %p44 = por %p42, %p43
      %p45 = scmp.ne.s32.totalorder %s36, %s37
      %p46 = scmp.eq.s32.totalorder %s19, 0
      %p47 = por %p45, %p46
      %p48 = scmp.ne.s32.totalorder %s36, %s37
      %p49 = scmp.eq.s32.totalorder %s20, 3
      %p50 = por %p48, %p49
      %p52 = scmp.ne.s32.totalorder %s37, %s51
      %p53 = scmp.eq.s32.totalorder %s20, 0
      %p54 = por %p52, %p53
      %s55 = ssub.s32 %s22, %s29
      %s56 = ssub.s32 %s21, %s33
      %s57 = sor.u32 %s55, %s56
      %p58 = scmp.eq.s32.totalorder %s57, 0
      %s60 = sadd.s32 %s59, 1
      %s61 = scalar_select %p58, %s59, %s60
      %p64 = pneg %p58
      %p65 = scmp.eq.s32.totalorder %s14, 3
      %p66 = por %p64, %p65
      %p67 = scmp.ne.s32.totalorder %s59, %s62
      %p68 = scmp.eq.s32.totalorder %s14, 0
      %p69 = por %p67, %p68
      %p70 = scmp.ne.s32.totalorder %s59, %s62
      %p71 = scmp.eq.s32.totalorder %s19, 3
      %p72 = por %p70, %p71
      %p73 = scmp.ne.s32.totalorder %s62, %s63
      %p74 = scmp.eq.s32.totalorder %s19, 0
      %p75 = por %p73, %p74
      %p76 = scmp.ne.s32.totalorder %s62, %s63
      %p77 = scmp.eq.s32.totalorder %s20, 3
      %p78 = por %p76, %p77
      %p80 = scmp.ne.s32.totalorder %s63, %s79
      %p81 = scmp.eq.s32.totalorder %s20, 0
      %p82 = por %p80, %p81
      %s83 = ssub.s32 %s22, %s29
      %s84 = ssub.s32 %s21, %s33
      %s85 = sor.u32 %s83, %s84
      %p86 = scmp.eq.s32.totalorder %s85, 0
      %s88 = sadd.s32 %s87, 1
      %s89 = scalar_select %p86, %s87, %s88
      %p92 = pneg %p86
      %p93 = scmp.eq.s32.totalorder %s14, 3
      %p94 = por %p92, %p93
      %p95 = scmp.ne.s32.totalorder %s87, %s90
      %p96 = scmp.eq.s32.totalorder %s14, 0
      %p97 = por %p95, %p96
      %p98 = scmp.ne.s32.totalorder %s87, %s90
      %p99 = scmp.eq.s32.totalorder %s19, 3
      %p100 = por %p98, %p99
      %p101 = scmp.ne.s32.totalorder %s90, %s91
      %p102 = scmp.eq.s32.totalorder %s19, 0
      %p103 = por %p101, %p102
      %p104 = scmp.ne.s32.totalorder %s90, %s91
      %p105 = scmp.eq.s32.totalorder %s20, 3
      %p106 = por %p104, %p105
      %p108 = scmp.ne.s32.totalorder %s91, %s107
      %p109 = scmp.eq.s32.totalorder %s20, 0
      %p110 = por %p108, %p109
      %s111 = ssub.s32 %s22, %s29
      %s112 = ssub.s32 %s21, %s33
      %s113 = sor.u32 %s111, %s112
      %p114 = scmp.eq.s32.totalorder %s113, 0
      %s116 = sadd.s32 %s115, 1
      %s117 = scalar_select %p114, %s115, %s116
      %p120 = pneg %p114
      %p121 = scmp.eq.s32.totalorder %s14, 3
      %p122 = por %p120, %p121
      %p123 = scmp.ne.s32.totalorder %s115, %s118
      %p124 = scmp.eq.s32.totalorder %s14, 0
      %p125 = por %p123, %p124
      %p126 = scmp.ne.s32.totalorder %s115, %s118
      %p127 = scmp.eq.s32.totalorder %s19, 3
      %p128 = por %p126, %p127
      %p129 = scmp.ne.s32.totalorder %s118, %s119
      %p130 = scmp.eq.s32.totalorder %s19, 0
      %p131 = por %p129, %p130
      %p132 = scmp.ne.s32.totalorder %s118, %s119
      %p133 = scmp.eq.s32.totalorder %s20, 3
      %p134 = por %p132, %p133
      %p136 = scmp.ne.s32.totalorder %s119, %s135
      %p137 = scmp.eq.s32.totalorder %s20, 0
      %p138 = por %p136, %p137
      %s139 = ssub.s32 %s22, %s29
      %s140 = ssub.s32 %s21, %s33
      %s141 = sor.u32 %s139, %s140
      %p142 = scmp.eq.s32.totalorder %s141, 0
      %s144 = sadd.s32 %s143, 1
      %s145 = scalar_select %p142, %s143, %s144
      %p148 = pneg %p142
      %p149 = scmp.eq.s32.totalorder %s14, 3
      %p150 = por %p148, %p149
      %p151 = scmp.ne.s32.totalorder %s143, %s146
      %p152 = scmp.eq.s32.totalorder %s14, 0
      %p153 = por %p151, %p152
      %p154 = scmp.ne.s32.totalorder %s143, %s146
      %p155 = scmp.eq.s32.totalorder %s19, 3
      %p156 = por %p154, %p155
      %p157 = scmp.ne.s32.totalorder %s146, %s147
      %p158 = scmp.eq.s32.totalorder %s19, 0
      %p159 = por %p157, %p158
      %p160 = scmp.ne.s32.totalorder %s146, %s147
      %p161 = scmp.eq.s32.totalorder %s20, 3
      %p162 = por %p160, %p161
      %p164 = scmp.ne.s32.totalorder %s147, %s163
      %p165 = scmp.eq.s32.totalorder %s20, 0
      %p166 = por %p164, %p165
      %p167 = scmp.le.s32.totalorder 1, %s14
      %p168 = scmp.lt.s32.totalorder %s14, 5
      %p169 = pnand %p167, %p168
      %p170 = pneg %p169
      // Predicated region
      $region9: #{tpu_custom_call.1} parent=5 // pred_check
        _
      $region10: #{tpu_custom_call.1} parent=5 // pred_check_branch
        %172 = sbr.rel (%p169) target = $region12
      $region11: #{tpu_custom_call.1} parent=5 // pred_region
        %s173 = ssub.s32 %s14, 1
        // Predicated region
        $region13: #{tpu_custom_call.1} parent=11 // pred_check
          %p174 = pneg %p47
        $region14: #{tpu_custom_call.1} parent=11 // pred_check_branch
          %176 = sbr.rel (%p174) target = $region16
        $region15: #{tpu_custom_call.1} parent=11 // pred_region
          %178 = vsyncadd [#allocation4], 0
          %s180 = sshll.u32 %s0, 4
          %s181 = int_to_ptr.vmem [resolvable:$true] %s180
          %183 = dma.vmem_to_smem %s181, 16, [#allocation2], [#allocation4]
        $region16: #{tpu_custom_call.1} parent=11 // pred_fallthru
          _
      $region12: #{tpu_custom_call.1} parent=5 // pred_fallthru
        _
      %p184 = scmp.lt.s32.totalorder %s14, 4
      // Predicated region
      $region17: #{tpu_custom_call.1} parent=5 // pred_check
        %p185 = pneg %p184
      $region18: #{tpu_custom_call.1} parent=5 // pred_check_branch
        %187 = sbr.rel (%p185) target = $region20
      $region19: #{tpu_custom_call.1} parent=5 // pred_region
        // Predicated region
        $region21: #{tpu_custom_call.1} parent=19 // pred_check
          %p188 = pneg %p69
        $region22: #{tpu_custom_call.1} parent=19 // pred_check_branch
          %190 = sbr.rel (%p188) target = $region24
        $region23: #{tpu_custom_call.1} parent=19 // pred_region
          %s191 = sand.u32 %s59, 1
          %s192 = sand.u32 %s59, 1
          %s193 = smul.addr %s192, 48
          %s194 = scalar_lea.vmem [#allocation5], %s193
          %s195 = smul.u32 2, %s22
          %s196 = smul.addr %s21, 3
          %s197 = smul.addr %s195, 12
          %s198 = sadd.s32 %s196, %s197
          %s199 = smul.addr %s198, 8
          %s200 = scalar_lea.vmem %s1, %s199
          // Predicated region
          $region25: #{tpu_custom_call.1} parent=23 // pred_check
            _
          $region26: #{tpu_custom_call.1} parent=23 // pred_check_branch
            %202 = sbr.rel (0) target = $region28
          $region27: #{tpu_custom_call.1} parent=23 // pred_region
            // Predicated region
            $region29: #{tpu_custom_call.1} parent=27 // pred_check
              _
            $region30: #{tpu_custom_call.1} parent=27 // pred_check_branch
              %204 = sbr.rel (0) target = $region32
            $region31: #{tpu_custom_call.1} parent=27 // pred_region
              // Predicated region
              $region44: #{tpu_custom_call.1} parent=31 // pred_check
                _
              $region45: #{tpu_custom_call.1} parent=31 // pred_check_branch
                %230 = sbr.rel (0) target = $region47
              $region46: #{tpu_custom_call.1} parent=31 // pred_region
                loop: start=0, step=1, limit=1
                $region48: #{tpu_custom_call.1} parent=46 // loop_pre_header
                  _
                $region49: #{tpu_custom_call.1} parent=46 // loop_header
                  %s232 = sphi 0, %s236
                  %p233 = scmp.ge.s32.totalorder %s232, 1
                  %s237 = sphi %s200, %s200
                  %s238 = sphi %s194, %s194
                $region50: #{tpu_custom_call.1} parent=46 // loop_header_branch
                  %235 = sbr.rel (%p233) target = $region54
                $region51: #{tpu_custom_call.1} parent=46 // loop_body
                  %v239 = vld [vmem:[%s237] sm:$0xff]
                  %240 = vst [vmem:[%s238] sm:$0xff] %v239
                  %v241 = vld [vmem:[%s237 + $0x8] sm:$0xff]
                  %242 = vst [vmem:[%s238 + $0x8] sm:$0xff] %v241
                  %v243 = vld [vmem:[%s237 + $0x10] sm:$0xff]
                  %244 = vst [vmem:[%s238 + $0x10] sm:$0xff] %v243
                  %v245 = vld [vmem:[%s237 + $0x60] sm:$0xff]
                  %246 = vst [vmem:[%s238 + $0x18] sm:$0xff] %v245
                  %v247 = vld [vmem:[%s237 + $0x68] sm:$0xff]
                  %248 = vst [vmem:[%s238 + $0x20] sm:$0xff] %v247
                  %v249 = vld [vmem:[%s237 + $0x70] sm:$0xff]
                  %250 = vst [vmem:[%s238 + $0x28] sm:$0xff] %v249
                $region52: #{tpu_custom_call.1} parent=46 // loop_footer
                  %s236 = sadd.s32 1, %s232
                $region53: #{tpu_custom_call.1} parent=46 // loop_footer_branch
                  %231 = sbr.rel target = $region49
                $region54: #{tpu_custom_call.1} parent=46 // loop_exit
                  _
              $region47: #{tpu_custom_call.1} parent=31 // pred_fallthru
                _
              // Predicated region
              $region55: #{tpu_custom_call.1} parent=31 // pred_check
                _
              $region56: #{tpu_custom_call.1} parent=31 // pred_check_branch
                %252 = sbr.rel target = $region58
              $region57: #{tpu_custom_call.1} parent=31 // pred_region
                _
              $region58: #{tpu_custom_call.1} parent=31 // pred_fallthru
                _
            $region32: #{tpu_custom_call.1} parent=27 // pred_fallthru
              _
            // Predicated region
            $region33: #{tpu_custom_call.1} parent=27 // pred_check
              _
            $region34: #{tpu_custom_call.1} parent=27 // pred_check_branch
              %206 = sbr.rel target = $region36
            $region35: #{tpu_custom_call.1} parent=27 // pred_region
              %s208 = ssub.s32 256, 1
              loop: start=0, step=1, limit=1
              $region37: #{tpu_custom_call.1} parent=35 // loop_pre_header
                _
              $region38: #{tpu_custom_call.1} parent=35 // loop_header
                %s210 = sphi 0, %s214
                %p211 = scmp.ge.s32.totalorder %s210, 1
                %s215 = sphi %s200, %s200
                %s216 = sphi %s194, %s194
              $region39: #{tpu_custom_call.1} parent=35 // loop_header_branch
                %213 = sbr.rel (%p211) target = $region43
              $region40: #{tpu_custom_call.1} parent=35 // loop_body
                %v217 = vld [vmem:[%s215] sm:%s208]
                %218 = vst [vmem:[%s216] sm:%s208] %v217
                %v219 = vld [vmem:[%s215 + $0x8] sm:%s208]
                %220 = vst [vmem:[%s216 + $0x8] sm:%s208] %v219
                %v221 = vld [vmem:[%s215 + $0x10] sm:%s208]
                %222 = vst [vmem:[%s216 + $0x10] sm:%s208] %v221
                %v223 = vld [vmem:[%s215 + $0x60] sm:%s208]
                %224 = vst [vmem:[%s216 + $0x18] sm:%s208] %v223
                %v225 = vld [vmem:[%s215 + $0x68] sm:%s208]
                %226 = vst [vmem:[%s216 + $0x20] sm:%s208] %v225
                %v227 = vld [vmem:[%s215 + $0x70] sm:%s208]
                %228 = vst [vmem:[%s216 + $0x28] sm:%s208] %v227
              $region41: #{tpu_custom_call.1} parent=35 // loop_footer
                %s214 = sadd.s32 1, %s210
              $region42: #{tpu_custom_call.1} parent=35 // loop_footer_branch
                %209 = sbr.rel target = $region38
              $region43: #{tpu_custom_call.1} parent=35 // loop_exit
                _
            $region36: #{tpu_custom_call.1} parent=27 // pred_fallthru
              _
          $region28: #{tpu_custom_call.1} parent=23 // pred_fallthru
            _
          %253 = vnop
        $region24: #{tpu_custom_call.1} parent=19 // pred_fallthru
          _
        // Predicated region
        $region59: #{tpu_custom_call.1} parent=19 // pred_check
          %p254 = pneg %p97
        $region60: #{tpu_custom_call.1} parent=19 // pred_check_branch
          %256 = sbr.rel (%p254) target = $region62
        $region61: #{tpu_custom_call.1} parent=19 // pred_region
          %s257 = sand.u32 %s87, 1
          %s258 = sand.u32 %s87, 1
          %s259 = smul.addr %s258, 48
          %s260 = scalar_lea.vmem [#allocation6], %s259
          %s261 = smul.u32 2, %s22
          %s262 = smul.addr %s21, 3
          %s263 = smul.addr %s261, 12
          %s264 = sadd.s32 %s262, %s263
          %s265 = smul.addr %s264, 8
          %s266 = scalar_lea.vmem %s2, %s265
          // Predicated region
          $region63: #{tpu_custom_call.1} parent=61 // pred_check
            _
          $region64: #{tpu_custom_call.1} parent=61 // pred_check_branch
            %268 = sbr.rel (0) target = $region66
          $region65: #{tpu_custom_call.1} parent=61 // pred_region
            // Predicated region
            $region67: #{tpu_custom_call.1} parent=65 // pred_check
              _
            $region68: #{tpu_custom_call.1} parent=65 // pred_check_branch
              %270 = sbr.rel (0) target = $region70
            $region69: #{tpu_custom_call.1} parent=65 // pred_region
              // Predicated region
              $region82: #{tpu_custom_call.1} parent=69 // pred_check
                _
              $region83: #{tpu_custom_call.1} parent=69 // pred_check_branch
                %296 = sbr.rel (0) target = $region85
              $region84: #{tpu_custom_call.1} parent=69 // pred_region
                loop: start=0, step=1, limit=1
                $region86: #{tpu_custom_call.1} parent=84 // loop_pre_header
                  _
                $region87: #{tpu_custom_call.1} parent=84 // loop_header
                  %s298 = sphi 0, %s302
                  %p299 = scmp.ge.s32.totalorder %s298, 1
                  %s303 = sphi %s266, %s266
                  %s304 = sphi %s260, %s260
                $region88: #{tpu_custom_call.1} parent=84 // loop_header_branch
                  %301 = sbr.rel (%p299) target = $region92
                $region89: #{tpu_custom_call.1} parent=84 // loop_body
                  %v305 = vld [vmem:[%s303] sm:$0xff]
                  %306 = vst [vmem:[%s304] sm:$0xff] %v305
                  %v307 = vld [vmem:[%s303 + $0x8] sm:$0xff]
                  %308 = vst [vmem:[%s304 + $0x8] sm:$0xff] %v307
                  %v309 = vld [vmem:[%s303 + $0x10] sm:$0xff]
                  %310 = vst [vmem:[%s304 + $0x10] sm:$0xff] %v309
                  %v311 = vld [vmem:[%s303 + $0x60] sm:$0xff]
                  %312 = vst [vmem:[%s304 + $0x18] sm:$0xff] %v311
                  %v313 = vld [vmem:[%s303 + $0x68] sm:$0xff]
                  %314 = vst [vmem:[%s304 + $0x20] sm:$0xff] %v313
                  %v315 = vld [vmem:[%s303 + $0x70] sm:$0xff]
                  %316 = vst [vmem:[%s304 + $0x28] sm:$0xff] %v315
                $region90: #{tpu_custom_call.1} parent=84 // loop_footer
                  %s302 = sadd.s32 1, %s298
                $region91: #{tpu_custom_call.1} parent=84 // loop_footer_branch
                  %297 = sbr.rel target = $region87
                $region92: #{tpu_custom_call.1} parent=84 // loop_exit
                  _
              $region85: #{tpu_custom_call.1} parent=69 // pred_fallthru
                _
              // Predicated region
              $region93: #{tpu_custom_call.1} parent=69 // pred_check
                _
              $region94: #{tpu_custom_call.1} parent=69 // pred_check_branch
                %318 = sbr.rel target = $region96
              $region95: #{tpu_custom_call.1} parent=69 // pred_region
                _
              $region96: #{tpu_custom_call.1} parent=69 // pred_fallthru
                _
            $region70: #{tpu_custom_call.1} parent=65 // pred_fallthru
              _
            // Predicated region
            $region71: #{tpu_custom_call.1} parent=65 // pred_check
              _
            $region72: #{tpu_custom_call.1} parent=65 // pred_check_branch
              %272 = sbr.rel target = $region74
            $region73: #{tpu_custom_call.1} parent=65 // pred_region
              %s274 = ssub.s32 256, 1
              loop: start=0, step=1, limit=1
              $region75: #{tpu_custom_call.1} parent=73 // loop_pre_header
                _
              $region76: #{tpu_custom_call.1} parent=73 // loop_header
                %s276 = sphi 0, %s280
                %p277 = scmp.ge.s32.totalorder %s276, 1
                %s281 = sphi %s266, %s266
                %s282 = sphi %s260, %s260
              $region77: #{tpu_custom_call.1} parent=73 // loop_header_branch
                %279 = sbr.rel (%p277) target = $region81
              $region78: #{tpu_custom_call.1} parent=73 // loop_body
                %v283 = vld [vmem:[%s281] sm:%s274]
                %284 = vst [vmem:[%s282] sm:%s274] %v283
                %v285 = vld [vmem:[%s281 + $0x8] sm:%s274]
                %286 = vst [vmem:[%s282 + $0x8] sm:%s274] %v285
                %v287 = vld [vmem:[%s281 + $0x10] sm:%s274]
                %288 = vst [vmem:[%s282 + $0x10] sm:%s274] %v287
                %v289 = vld [vmem:[%s281 + $0x60] sm:%s274]
                %290 = vst [vmem:[%s282 + $0x18] sm:%s274] %v289
                %v291 = vld [vmem:[%s281 + $0x68] sm:%s274]
                %292 = vst [vmem:[%s282 + $0x20] sm:%s274] %v291
                %v293 = vld [vmem:[%s281 + $0x70] sm:%s274]
                %294 = vst [vmem:[%s282 + $0x28] sm:%s274] %v293
              $region79: #{tpu_custom_call.1} parent=73 // loop_footer
                %s280 = sadd.s32 1, %s276
              $region80: #{tpu_custom_call.1} parent=73 // loop_footer_branch
                %275 = sbr.rel target = $region76
              $region81: #{tpu_custom_call.1} parent=73 // loop_exit
                _
            $region74: #{tpu_custom_call.1} parent=65 // pred_fallthru
              _
          $region66: #{tpu_custom_call.1} parent=61 // pred_fallthru
            _
          %319 = vnop
        $region62: #{tpu_custom_call.1} parent=19 // pred_fallthru
          _
        // Predicated region
        $region97: #{tpu_custom_call.1} parent=19 // pred_check
          %p320 = pneg %p125
        $region98: #{tpu_custom_call.1} parent=19 // pred_check_branch
          %322 = sbr.rel (%p320) target = $region100
        $region99: #{tpu_custom_call.1} parent=19 // pred_region
          %s323 = sand.u32 %s115, 1
          %s324 = sand.u32 %s115, 1
          %s325 = smul.addr %s324, 48
          %s326 = scalar_lea.vmem [#allocation7], %s325
          %s327 = smul.u32 2, %s22
          %s328 = smul.addr %s21, 3
          %s329 = smul.addr %s327, 12
          %s330 = sadd.s32 %s328, %s329
          %s331 = smul.addr %s330, 8
          %s332 = scalar_lea.vmem %s3, %s331
          // Predicated region
          $region101: #{tpu_custom_call.1} parent=99 // pred_check
            _
          $region102: #{tpu_custom_call.1} parent=99 // pred_check_branch
            %334 = sbr.rel (0) target = $region104
          $region103: #{tpu_custom_call.1} parent=99 // pred_region
            // Predicated region
            $region105: #{tpu_custom_call.1} parent=103 // pred_check
              _
            $region106: #{tpu_custom_call.1} parent=103 // pred_check_branch
              %336 = sbr.rel (0) target = $region108
            $region107: #{tpu_custom_call.1} parent=103 // pred_region
              // Predicated region
              $region120: #{tpu_custom_call.1} parent=107 // pred_check
                _
              $region121: #{tpu_custom_call.1} parent=107 // pred_check_branch
                %362 = sbr.rel (0) target = $region123
              $region122: #{tpu_custom_call.1} parent=107 // pred_region
                loop: start=0, step=1, limit=1
                $region124: #{tpu_custom_call.1} parent=122 // loop_pre_header
                  _
                $region125: #{tpu_custom_call.1} parent=122 // loop_header
                  %s364 = sphi 0, %s368
                  %p365 = scmp.ge.s32.totalorder %s364, 1
                  %s369 = sphi %s332, %s332
                  %s370 = sphi %s326, %s326
                $region126: #{tpu_custom_call.1} parent=122 // loop_header_branch
                  %367 = sbr.rel (%p365) target = $region130
                $region127: #{tpu_custom_call.1} parent=122 // loop_body
                  %v371 = vld [vmem:[%s369] sm:$0xff]
                  %372 = vst [vmem:[%s370] sm:$0xff] %v371
                  %v373 = vld [vmem:[%s369 + $0x8] sm:$0xff]
                  %374 = vst [vmem:[%s370 + $0x8] sm:$0xff] %v373
                  %v375 = vld [vmem:[%s369 + $0x10] sm:$0xff]
                  %376 = vst [vmem:[%s370 + $0x10] sm:$0xff] %v375
                  %v377 = vld [vmem:[%s369 + $0x60] sm:$0xff]
                  %378 = vst [vmem:[%s370 + $0x18] sm:$0xff] %v377
                  %v379 = vld [vmem:[%s369 + $0x68] sm:$0xff]
                  %380 = vst [vmem:[%s370 + $0x20] sm:$0xff] %v379
                  %v381 = vld [vmem:[%s369 + $0x70] sm:$0xff]
                  %382 = vst [vmem:[%s370 + $0x28] sm:$0xff] %v381
                $region128: #{tpu_custom_call.1} parent=122 // loop_footer
                  %s368 = sadd.s32 1, %s364
                $region129: #{tpu_custom_call.1} parent=122 // loop_footer_branch
                  %363 = sbr.rel target = $region125
                $region130: #{tpu_custom_call.1} parent=122 // loop_exit
                  _
              $region123: #{tpu_custom_call.1} parent=107 // pred_fallthru
                _
              // Predicated region
              $region131: #{tpu_custom_call.1} parent=107 // pred_check
                _
              $region132: #{tpu_custom_call.1} parent=107 // pred_check_branch
                %384 = sbr.rel target = $region134
              $region133: #{tpu_custom_call.1} parent=107 // pred_region
                _
              $region134: #{tpu_custom_call.1} parent=107 // pred_fallthru
                _
            $region108: #{tpu_custom_call.1} parent=103 // pred_fallthru
              _
            // Predicated region
            $region109: #{tpu_custom_call.1} parent=103 // pred_check
              _
            $region110: #{tpu_custom_call.1} parent=103 // pred_check_branch
              %338 = sbr.rel target = $region112
            $region111: #{tpu_custom_call.1} parent=103 // pred_region
              %s340 = ssub.s32 256, 1
              loop: start=0, step=1, limit=1
              $region113: #{tpu_custom_call.1} parent=111 // loop_pre_header
                _
              $region114: #{tpu_custom_call.1} parent=111 // loop_header
                %s342 = sphi 0, %s346
                %p343 = scmp.ge.s32.totalorder %s342, 1
                %s347 = sphi %s332, %s332
                %s348 = sphi %s326, %s326
              $region115: #{tpu_custom_call.1} parent=111 // loop_header_branch
                %345 = sbr.rel (%p343) target = $region119
              $region116: #{tpu_custom_call.1} parent=111 // loop_body
                %v349 = vld [vmem:[%s347] sm:%s340]
                %350 = vst [vmem:[%s348] sm:%s340] %v349
                %v351 = vld [vmem:[%s347 + $0x8] sm:%s340]
                %352 = vst [vmem:[%s348 + $0x8] sm:%s340] %v351
                %v353 = vld [vmem:[%s347 + $0x10] sm:%s340]
                %354 = vst [vmem:[%s348 + $0x10] sm:%s340] %v353
                %v355 = vld [vmem:[%s347 + $0x60] sm:%s340]
                %356 = vst [vmem:[%s348 + $0x18] sm:%s340] %v355
                %v357 = vld [vmem:[%s347 + $0x68] sm:%s340]
                %358 = vst [vmem:[%s348 + $0x20] sm:%s340] %v357
                %v359 = vld [vmem:[%s347 + $0x70] sm:%s340]
                %360 = vst [vmem:[%s348 + $0x28] sm:%s340] %v359
              $region117: #{tpu_custom_call.1} parent=111 // loop_footer
                %s346 = sadd.s32 1, %s342
              $region118: #{tpu_custom_call.1} parent=111 // loop_footer_branch
                %341 = sbr.rel target = $region114
              $region119: #{tpu_custom_call.1} parent=111 // loop_exit
                _
            $region112: #{tpu_custom_call.1} parent=103 // pred_fallthru
              _
          $region104: #{tpu_custom_call.1} parent=99 // pred_fallthru
            _
          %385 = vnop
        $region100: #{tpu_custom_call.1} parent=19 // pred_fallthru
          _
      $region20: #{tpu_custom_call.1} parent=5 // pred_fallthru
        _
      %p386 = scmp.le.s32.totalorder 1, %s14
      %p387 = scmp.lt.s32.totalorder %s14, 5
      %p388 = pnand %p386, %p387
      %p389 = pneg %p388
      // Predicated region
      $region135: #{tpu_custom_call.1} parent=5 // pred_check
        _
      $region136: #{tpu_custom_call.1} parent=5 // pred_check_branch
        %391 = sbr.rel (%p388) target = $region138
      $region137: #{tpu_custom_call.1} parent=5 // pred_region
        %s392 = ssub.s32 %s14, 1
        // Predicated region
        $region139: #{tpu_custom_call.1} parent=137 // pred_check
          %p393 = pneg %p47
        $region140: #{tpu_custom_call.1} parent=137 // pred_check_branch
          %395 = sbr.rel (%p393) target = $region142
        $region141: #{tpu_custom_call.1} parent=137 // pred_region
          %397 = dma.done [#allocation4], 16
        $region142: #{tpu_custom_call.1} parent=137 // pred_fallthru
          _
        %s398 = sand.u32 %s62, 1
        %s399 = sand.u32 %s62, 1
        %s400 = smul.addr %s399, 48
        %s401 = scalar_lea.vmem [#allocation5], %s400
        // Predicated region
        $region143: #{tpu_custom_call.1} parent=137 // pred_check
          %p402 = pneg %p75
        $region144: #{tpu_custom_call.1} parent=137 // pred_check_branch
          %404 = sbr.rel (%p402) target = $region146
        $region145: #{tpu_custom_call.1} parent=137 // pred_region
          _
        $region146: #{tpu_custom_call.1} parent=137 // pred_fallthru
          _
        %s405 = sand.u32 %s90, 1
        %s406 = sand.u32 %s90, 1
        %s407 = smul.addr %s406, 48
        %s408 = scalar_lea.vmem [#allocation6], %s407
        // Predicated region
        $region147: #{tpu_custom_call.1} parent=137 // pred_check
          %p409 = pneg %p103
        $region148: #{tpu_custom_call.1} parent=137 // pred_check_branch
          %411 = sbr.rel (%p409) target = $region150
        $region149: #{tpu_custom_call.1} parent=137 // pred_region
          _
        $region150: #{tpu_custom_call.1} parent=137 // pred_fallthru
          _
        %s412 = sand.u32 %s118, 1
        %s413 = sand.u32 %s118, 1
        %s414 = smul.addr %s413, 48
        %s415 = scalar_lea.vmem [#allocation7], %s414
        // Predicated region
        $region151: #{tpu_custom_call.1} parent=137 // pred_check
          %p416 = pneg %p131
        $region152: #{tpu_custom_call.1} parent=137 // pred_check_branch
          %418 = sbr.rel (%p416) target = $region154
        $region153: #{tpu_custom_call.1} parent=137 // pred_region
          _
        $region154: #{tpu_custom_call.1} parent=137 // pred_fallthru
          _
        %419 = sfence
        %p420 = pneg %p47
        %p421 = pneg %p44
        %s422 = sand.u32 %s62, 1
        %s423 = sand.u32 %s62, 1
        %s424 = smul.addr %s423, 48
        %s425 = scalar_lea.vmem [#allocation5], %s424
        %p426 = pneg %p75
        %p427 = pneg %p72
        %s428 = sand.u32 %s90, 1
        %s429 = sand.u32 %s90, 1
        %s430 = smul.addr %s429, 48
        %s431 = scalar_lea.vmem [#allocation6], %s430
        %p432 = pneg %p103
        %p433 = pneg %p100
        %s434 = sand.u32 %s118, 1
        %s435 = sand.u32 %s118, 1
        %s436 = smul.addr %s435, 48
        %s437 = scalar_lea.vmem [#allocation7], %s436
        %p438 = pneg %p131
        %p439 = pneg %p128
        %p440 = pneg %p159
        %p441 = pneg %p156
        %s442 = sand.u32 %s146, 1
        %s443 = scalar_lea.sflag [#allocation3], %s442
        %s444 = sand.u32 %s146, 1
        %s445 = smul.addr %s444, 32
        %s446 = scalar_lea.vmem [#allocation8], %s445
        %s447 = smul.u32 2, %s24
        %s448 = smul.u32 2, %s24
        %s449 = smul.u32 2, %s24
        %s450 = smul.u32 2, %s24
        %s451 = smul.u32 %s23, 27
        %v452 = vld [vmem:[%s401] sm:$0xff]
        %v453 = vld [vmem:[%s401 + $0x8] sm:$0xff]
        %v454 = vld [vmem:[%s401 + $0x10] sm:$0x3]
        %s455 = sld [smem:[#allocation2 + %s451]]
        %v456 = vstv %s455
        %v457 = vmul.f32 %v456, %v452
        %v458 = vmul.f32 %v456, %v453
        %s459 = sadd.s32 %s451, 1
        %s460 = sld [smem:[#allocation2 + %s459]]
        %v461 = vstv %s460
        %v462 = vmul.f32 %v461, %v452
        %v463 = vmul.f32 %v461, %v453
        %466 = vrot.lane.b32.xlu0 %v462, 127
        %v467 = vpop.permute.xlu0 %466
        %468 = vrot.lane.b32.xlu0 %v463, 127
        %v469 = vpop.permute.xlu0 %468
        %v472 = vadd.f32 %v457, %v467
        %v473 = vadd.f32 %v458, %v469
        %s474 = sadd.s32 %s451, 2
        %s475 = sld [smem:[#allocation2 + %s474]]
        %v476 = vstv %s475
        %v477 = vmul.f32 %v476, %v452
        %v478 = vmul.f32 %v476, %v453
        %481 = vrot.lane.b32.xlu0 %v477, 126
        %v482 = vpop.permute.xlu0 %481
        %483 = vrot.lane.b32.xlu0 %v478, 126
        %v484 = vpop.permute.xlu0 %483
        %v487 = vadd.f32 %v472, %v482
        %v488 = vadd.f32 %v473, %v484
        %s489 = sadd.s32 %s451, 3
        %s490 = sld [smem:[#allocation2 + %s489]]
        %v491 = vstv %s490
        %v492 = vmul.f32 %v491, %v452
        %v493 = vmul.f32 %v491, %v453
        %v494 = vmul.f32 %v491, %v454
        %vm498 = vcmask 1046528
        %v499 = vrot.slane %v492, 1
        %v500 = vrot.slane %v493, 1
        %v501 = vsel %vm498, %v499, %v500
        %v502 = vrot.slane %v494, 1
        %v503 = vsel %vm498, %v500, %v502
        %v506 = vadd.f32 %v487, %v501
        %v507 = vadd.f32 %v488, %v503
        %s508 = sadd.s32 %s451, 4
        %s509 = sld [smem:[#allocation2 + %s508]]
        %v510 = vstv %s509
        %v511 = vmul.f32 %v510, %v452
        %v512 = vmul.f32 %v510, %v453
        %v513 = vmul.f32 %v510, %v454
        %v517 = vrot.slane %v511, 1
        %v518 = vrot.slane %v512, 1
        %v519 = vsel %vm498, %v517, %v518
        %v520 = vrot.slane %v513, 1
        %v521 = vsel %vm498, %v518, %v520
        %522 = vrot.lane.b32.xlu0 %v519, 127
        %v523 = vpop.permute.xlu0 %522
        %524 = vrot.lane.b32.xlu0 %v521, 127
        %v525 = vpop.permute.xlu0 %524
        %v528 = vadd.f32 %v506, %v523
        %v529 = vadd.f32 %v507, %v525
        %s530 = sadd.s32 %s451, 5
        %s531 = sld [smem:[#allocation2 + %s530]]
        %v532 = vstv %s531
        %v533 = vmul.f32 %v532, %v452
        %v534 = vmul.f32 %v532, %v453
        %v535 = vmul.f32 %v532, %v454
        %v539 = vrot.slane %v533, 1
        %v540 = vrot.slane %v534, 1
        %v541 = vsel %vm498, %v539, %v540
        %v542 = vrot.slane %v535, 1
        %v543 = vsel %vm498, %v540, %v542
        %544 = vrot.lane.b32.xlu0 %v541, 126
        %v545 = vpop.permute.xlu0 %544
        %546 = vrot.lane.b32.xlu0 %v543, 126
        %v547 = vpop.permute.xlu0 %546
        %v550 = vadd.f32 %v528, %v545
        %v551 = vadd.f32 %v529, %v547
        %s552 = sadd.s32 %s451, 6
        %s553 = sld [smem:[#allocation2 + %s552]]
        %v554 = vstv %s553
        %v555 = vmul.f32 %v554, %v452
        %v556 = vmul.f32 %v554, %v453
        %v557 = vmul.f32 %v554, %v454
        %vm561 = vcmask 1045504
        %v562 = vrot.slane %v555, 2
        %v563 = vrot.slane %v556, 2
        %v564 = vsel %vm561, %v562, %v563
        %v565 = vrot.slane %v557, 2
        %v566 = vsel %vm561, %v563, %v565
        %v569 = vadd.f32 %v550, %v564
        %v570 = vadd.f32 %v551, %v566
        %s571 = sadd.s32 %s451, 7
        %s572 = sld [smem:[#allocation2 + %s571]]
        %v573 = vstv %s572
        %v574 = vmul.f32 %v573, %v452
        %v575 = vmul.f32 %v573, %v453
        %v576 = vmul.f32 %v573, %v454
        %v580 = vrot.slane %v574, 2
        %v581 = vrot.slane %v575, 2
        %v582 = vsel %vm561, %v580, %v581
        %v583 = vrot.slane %v576, 2
        %v584 = vsel %vm561, %v581, %v583
        %585 = vrot.lane.b32.xlu0 %v582, 127
        %v586 = vpop.permute.xlu0 %585
        %587 = vrot.lane.b32.xlu0 %v584, 127
        %v588 = vpop.permute.xlu0 %587
        %v591 = vadd.f32 %v569, %v586
        %v592 = vadd.f32 %v570, %v588
        %s593 = sadd.s32 %s451, 8
        %s594 = sld [smem:[#allocation2 + %s593]]
        %v595 = vstv %s594
        %v596 = vmul.f32 %v595, %v452
        %v597 = vmul.f32 %v595, %v453
        %v598 = vmul.f32 %v595, %v454
        %v602 = vrot.slane %v596, 2
        %v603 = vrot.slane %v597, 2
        %v604 = vsel %vm561, %v602, %v603
        %v605 = vrot.slane %v598, 2
        %v606 = vsel %vm561, %v603, %v605
        %607 = vrot.lane.b32.xlu0 %v604, 126
        %v608 = vpop.permute.xlu0 %607
        %609 = vrot.lane.b32.xlu0 %v606, 126
        %v610 = vpop.permute.xlu0 %609
        %v613 = vadd.f32 %v591, %v608
        %v614 = vadd.f32 %v592, %v610
        %v615 = vld [vmem:[%s408] sm:$0xff]
        %v616 = vld [vmem:[%s408 + $0x8] sm:$0xff]
        %v617 = vld [vmem:[%s408 + $0x10] sm:$0x3]
        %s618 = sadd.s32 %s451, 9
        %s619 = sld [smem:[#allocation2 + %s618]]
        %v620 = vstv %s619
        %v621 = vmul.f32 %v620, %v615
        %v622 = vmul.f32 %v620, %v616
        %s623 = sadd.s32 %s451, 10
        %s624 = sld [smem:[#allocation2 + %s623]]
        %v625 = vstv %s624
        %v626 = vmul.f32 %v625, %v615
        %v627 = vmul.f32 %v625, %v616
        %630 = vrot.lane.b32.xlu0 %v626, 127
        %v631 = vpop.permute.xlu0 %630
        %632 = vrot.lane.b32.xlu0 %v627, 127
        %v633 = vpop.permute.xlu0 %632
        %v636 = vadd.f32 %v621, %v631
        %v637 = vadd.f32 %v622, %v633
        %s638 = sadd.s32 %s451, 11
        %s639 = sld [smem:[#allocation2 + %s638]]
        %v640 = vstv %s639
        %v641 = vmul.f32 %v640, %v615
        %v642 = vmul.f32 %v640, %v616
        %645 = vrot.lane.b32.xlu0 %v641, 126
        %v646 = vpop.permute.xlu0 %645
        %647 = vrot.lane.b32.xlu0 %v642, 126
        %v648 = vpop.permute.xlu0 %647
        %v651 = vadd.f32 %v636, %v646
        %v652 = vadd.f32 %v637, %v648
        %s653 = sadd.s32 %s451, 12
        %s654 = sld [smem:[#allocation2 + %s653]]
        %v655 = vstv %s654
        %v656 = vmul.f32 %v655, %v615
        %v657 = vmul.f32 %v655, %v616
        %v658 = vmul.f32 %v655, %v617
        %v662 = vrot.slane %v656, 1
        %v663 = vrot.slane %v657, 1
        %v664 = vsel %vm498, %v662, %v663
        %v665 = vrot.slane %v658, 1
        %v666 = vsel %vm498, %v663, %v665
        %v669 = vadd.f32 %v651, %v664
        %v670 = vadd.f32 %v652, %v666
        %s671 = sadd.s32 %s451, 13
        %s672 = sld [smem:[#allocation2 + %s671]]
        %v673 = vstv %s672
        %v674 = vmul.f32 %v673, %v615
        %v675 = vmul.f32 %v673, %v616
        %v676 = vmul.f32 %v673, %v617
        %v680 = vrot.slane %v674, 1
        %v681 = vrot.slane %v675, 1
        %v682 = vsel %vm498, %v680, %v681
        %v683 = vrot.slane %v676, 1
        %v684 = vsel %vm498, %v681, %v683
        %685 = vrot.lane.b32.xlu0 %v682, 127
        %v686 = vpop.permute.xlu0 %685
        %687 = vrot.lane.b32.xlu0 %v684, 127
        %v688 = vpop.permute.xlu0 %687
        %v691 = vadd.f32 %v669, %v686
        %v692 = vadd.f32 %v670, %v688
        %s693 = sadd.s32 %s451, 14
        %s694 = sld [smem:[#allocation2 + %s693]]
        %v695 = vstv %s694
        %v696 = vmul.f32 %v695, %v615
        %v697 = vmul.f32 %v695, %v616
        %v698 = vmul.f32 %v695, %v617
        %v702 = vrot.slane %v696, 1
        %v703 = vrot.slane %v697, 1
        %v704 = vsel %vm498, %v702, %v703
        %v705 = vrot.slane %v698, 1
        %v706 = vsel %vm498, %v703, %v705
        %707 = vrot.lane.b32.xlu0 %v704, 126
        %v708 = vpop.permute.xlu0 %707
        %709 = vrot.lane.b32.xlu0 %v706, 126
        %v710 = vpop.permute.xlu0 %709
        %v713 = vadd.f32 %v691, %v708
        %v714 = vadd.f32 %v692, %v710
        %s715 = sadd.s32 %s451, 15
        %s716 = sld [smem:[#allocation2 + %s715]]
        %v717 = vstv %s716
        %v718 = vmul.f32 %v717, %v615
        %v719 = vmul.f32 %v717, %v616
        %v720 = vmul.f32 %v717, %v617
        %v724 = vrot.slane %v718, 2
        %v725 = vrot.slane %v719, 2
        %v726 = vsel %vm561, %v724, %v725
        %v727 = vrot.slane %v720, 2
        %v728 = vsel %vm561, %v725, %v727
        %v731 = vadd.f32 %v713, %v726
        %v732 = vadd.f32 %v714, %v728
        %s733 = sadd.s32 %s451, 16
        %s734 = sld [smem:[#allocation2 + %s733]]
        %v735 = vstv %s734
        %v736 = vmul.f32 %v735, %v615
        %v737 = vmul.f32 %v735, %v616
        %v738 = vmul.f32 %v735, %v617
        %v742 = vrot.slane %v736, 2
        %v743 = vrot.slane %v737, 2
        %v744 = vsel %vm561, %v742, %v743
        %v745 = vrot.slane %v738, 2
        %v746 = vsel %vm561, %v743, %v745
        %747 = vrot.lane.b32.xlu0 %v744, 127
        %v748 = vpop.permute.xlu0 %747
        %749 = vrot.lane.b32.xlu0 %v746, 127
        %v750 = vpop.permute.xlu0 %749
        %v753 = vadd.f32 %v731, %v748
        %v754 = vadd.f32 %v732, %v750
        %s755 = sadd.s32 %s451, 17
        %s756 = sld [smem:[#allocation2 + %s755]]
        %v757 = vstv %s756
        %v758 = vmul.f32 %v757, %v615
        %v759 = vmul.f32 %v757, %v616
        %v760 = vmul.f32 %v757, %v617
        %v764 = vrot.slane %v758, 2
        %v765 = vrot.slane %v759, 2
        %v766 = vsel %vm561, %v764, %v765
        %v767 = vrot.slane %v760, 2
        %v768 = vsel %vm561, %v765, %v767
        %769 = vrot.lane.b32.xlu0 %v766, 126
        %v770 = vpop.permute.xlu0 %769
        %771 = vrot.lane.b32.xlu0 %v768, 126
        %v772 = vpop.permute.xlu0 %771
        %v775 = vadd.f32 %v753, %v770
        %v776 = vadd.f32 %v754, %v772
        %v777 = vadd.f32 %v613, %v775
        %v778 = vadd.f32 %v614, %v776
        %v779 = vld [vmem:[%s415] sm:$0xff]
        %v780 = vld [vmem:[%s415 + $0x8] sm:$0xff]
        %v781 = vld [vmem:[%s415 + $0x10] sm:$0x3]
        %s782 = sadd.s32 %s451, 18
        %s783 = sld [smem:[#allocation2 + %s782]]
        %v784 = vstv %s783
        %v785 = vmul.f32 %v784, %v779
        %v786 = vmul.f32 %v784, %v780
        %s787 = sadd.s32 %s451, 19
        %s788 = sld [smem:[#allocation2 + %s787]]
        %v789 = vstv %s788
        %v790 = vmul.f32 %v789, %v779
        %v791 = vmul.f32 %v789, %v780
        %794 = vrot.lane.b32.xlu0 %v790, 127
        %v795 = vpop.permute.xlu0 %794
        %796 = vrot.lane.b32.xlu0 %v791, 127
        %v797 = vpop.permute.xlu0 %796
        %v800 = vadd.f32 %v785, %v795
        %v801 = vadd.f32 %v786, %v797
        %s802 = sadd.s32 %s451, 20
        %s803 = sld [smem:[#allocation2 + %s802]]
        %v804 = vstv %s803
        %v805 = vmul.f32 %v804, %v779
        %v806 = vmul.f32 %v804, %v780
        %809 = vrot.lane.b32.xlu0 %v805, 126
        %v810 = vpop.permute.xlu0 %809
        %811 = vrot.lane.b32.xlu0 %v806, 126
        %v812 = vpop.permute.xlu0 %811
        %v815 = vadd.f32 %v800, %v810
        %v816 = vadd.f32 %v801, %v812
        %s817 = sadd.s32 %s451, 21
        %s818 = sld [smem:[#allocation2 + %s817]]
        %v819 = vstv %s818
        %v820 = vmul.f32 %v819, %v779
        %v821 = vmul.f32 %v819, %v780
        %v822 = vmul.f32 %v819, %v781
        %v826 = vrot.slane %v820, 1
        %v827 = vrot.slane %v821, 1
        %v828 = vsel %vm498, %v826, %v827
        %v829 = vrot.slane %v822, 1
        %v830 = vsel %vm498, %v827, %v829
        %v833 = vadd.f32 %v815, %v828
        %v834 = vadd.f32 %v816, %v830
        %s835 = sadd.s32 %s451, 22
        %s836 = sld [smem:[#allocation2 + %s835]]
        %v837 = vstv %s836
        %v838 = vmul.f32 %v837, %v779
        %v839 = vmul.f32 %v837, %v780
        %v840 = vmul.f32 %v837, %v781
        %v844 = vrot.slane %v838, 1
        %v845 = vrot.slane %v839, 1
        %v846 = vsel %vm498, %v844, %v845
        %v847 = vrot.slane %v840, 1
        %v848 = vsel %vm498, %v845, %v847
        %849 = vrot.lane.b32.xlu0 %v846, 127
        %v850 = vpop.permute.xlu0 %849
        %851 = vrot.lane.b32.xlu0 %v848, 127
        %v852 = vpop.permute.xlu0 %851
        %v855 = vadd.f32 %v833, %v850
        %v856 = vadd.f32 %v834, %v852
        %s857 = sadd.s32 %s451, 23
        %s858 = sld [smem:[#allocation2 + %s857]]
        %v859 = vstv %s858
        %v860 = vmul.f32 %v859, %v779
        %v861 = vmul.f32 %v859, %v780
        %v862 = vmul.f32 %v859, %v781
        %v866 = vrot.slane %v860, 1
        %v867 = vrot.slane %v861, 1
        %v868 = vsel %vm498, %v866, %v867
        %v869 = vrot.slane %v862, 1
        %v870 = vsel %vm498, %v867, %v869
        %871 = vrot.lane.b32.xlu0 %v868, 126
        %v872 = vpop.permute.xlu0 %871
        %873 = vrot.lane.b32.xlu0 %v870, 126
        %v874 = vpop.permute.xlu0 %873
        %v877 = vadd.f32 %v855, %v872
        %v878 = vadd.f32 %v856, %v874
        %s879 = sadd.s32 %s451, 24
        %s880 = sld [smem:[#allocation2 + %s879]]
        %v881 = vstv %s880
        %v882 = vmul.f32 %v881, %v779
        %v883 = vmul.f32 %v881, %v780
        %v884 = vmul.f32 %v881, %v781
        %v888 = vrot.slane %v882, 2
        %v889 = vrot.slane %v883, 2
        %v890 = vsel %vm561, %v888, %v889
        %v891 = vrot.slane %v884, 2
        %v892 = vsel %vm561, %v889, %v891
        %v895 = vadd.f32 %v877, %v890
        %v896 = vadd.f32 %v878, %v892
        %s897 = sadd.s32 %s451, 25
        %s898 = sld [smem:[#allocation2 + %s897]]
        %v899 = vstv %s898
        %v900 = vmul.f32 %v899, %v779
        %v901 = vmul.f32 %v899, %v780
        %v902 = vmul.f32 %v899, %v781
        %v906 = vrot.slane %v900, 2
        %v907 = vrot.slane %v901, 2
        %v908 = vsel %vm561, %v906, %v907
        %v909 = vrot.slane %v902, 2
        %v910 = vsel %vm561, %v907, %v909
        %911 = vrot.lane.b32.xlu0 %v908, 127
        %v912 = vpop.permute.xlu0 %911
        %913 = vrot.lane.b32.xlu0 %v910, 127
        %v914 = vpop.permute.xlu0 %913
        %v917 = vadd.f32 %v895, %v912
        %v918 = vadd.f32 %v896, %v914
        %s919 = sadd.s32 %s451, 26
        %s920 = sld [smem:[#allocation2 + %s919]]
        %v921 = vstv %s920
        %v922 = vmul.f32 %v921, %v779
        %v923 = vmul.f32 %v921, %v780
        %v924 = vmul.f32 %v921, %v781
        %v928 = vrot.slane %v922, 2
        %v929 = vrot.slane %v923, 2
        %v930 = vsel %vm561, %v928, %v929
        %v931 = vrot.slane %v924, 2
        %v932 = vsel %vm561, %v929, %v931
        %933 = vrot.lane.b32.xlu0 %v930, 126
        %v934 = vpop.permute.xlu0 %933
        %935 = vrot.lane.b32.xlu0 %v932, 126
        %v936 = vpop.permute.xlu0 %935
        %v939 = vadd.f32 %v917, %v934
        %v940 = vadd.f32 %v918, %v936
        %v941 = vadd.f32 %v777, %v939
        %v942 = vadd.f32 %v778, %v940
        %vm943 = vcmask 130048
        %944 = vst.msk [vmem:[%s446] sm:$0xff] %vm943, %v941
        %945 = vst.msk [vmem:[%s446 + $0x8] sm:$0xff] %vm943, %v942
        %s946 = scalar_lea.vmem %s401, 24 [#allocation5]
        %v947 = vld [vmem:[%s946] sm:$0xff]
        %v948 = vld [vmem:[%s946 + $0x8] sm:$0xff]
        %v949 = vld [vmem:[%s946 + $0x10] sm:$0x3]
        %s950 = sld [smem:[#allocation2 + %s451]]
        %v951 = vstv %s950
        %v952 = vmul.f32 %v951, %v947
        %v953 = vmul.f32 %v951, %v948
        %s954 = sld [smem:[#allocation2 + %s459]]
        %v955 = vstv %s954
        %v956 = vmul.f32 %v955, %v947
        %v957 = vmul.f32 %v955, %v948
        %960 = vrot.lane.b32.xlu0 %v956, 127
        %v961 = vpop.permute.xlu0 %960
        %962 = vrot.lane.b32.xlu0 %v957, 127
        %v963 = vpop.permute.xlu0 %962
        %v966 = vadd.f32 %v952, %v961
        %v967 = vadd.f32 %v953, %v963
        %s968 = sld [smem:[#allocation2 + %s474]]
        %v969 = vstv %s968
        %v970 = vmul.f32 %v969, %v947
        %v971 = vmul.f32 %v969, %v948
        %974 = vrot.lane.b32.xlu0 %v970, 126
        %v975 = vpop.permute.xlu0 %974
        %976 = vrot.lane.b32.xlu0 %v971, 126
        %v977 = vpop.permute.xlu0 %976
        %v980 = vadd.f32 %v966, %v975
        %v981 = vadd.f32 %v967, %v977
        %s982 = sld [smem:[#allocation2 + %s489]]
        %v983 = vstv %s982
        %v984 = vmul.f32 %v983, %v947
        %v985 = vmul.f32 %v983, %v948
        %v986 = vmul.f32 %v983, %v949
        %v990 = vrot.slane %v984, 1
        %v991 = vrot.slane %v985, 1
        %v992 = vsel %vm498, %v990, %v991
        %v993 = vrot.slane %v986, 1
        %v994 = vsel %vm498, %v991, %v993
        %v997 = vadd.f32 %v980, %v992
        %v998 = vadd.f32 %v981, %v994
        %s999 = sld [smem:[#allocation2 + %s508]]
        %v1000 = vstv %s999
        %v1001 = vmul.f32 %v1000, %v947
        %v1002 = vmul.f32 %v1000, %v948
        %v1003 = vmul.f32 %v1000, %v949
        %v1007 = vrot.slane %v1001, 1
        %v1008 = vrot.slane %v1002, 1
        %v1009 = vsel %vm498, %v1007, %v1008
        %v1010 = vrot.slane %v1003, 1
        %v1011 = vsel %vm498, %v1008, %v1010
        %1012 = vrot.lane.b32.xlu0 %v1009, 127
        %v1013 = vpop.permute.xlu0 %1012
        %1014 = vrot.lane.b32.xlu0 %v1011, 127
        %v1015 = vpop.permute.xlu0 %1014
        %v1018 = vadd.f32 %v997, %v1013
        %v1019 = vadd.f32 %v998, %v1015
        %s1020 = sld [smem:[#allocation2 + %s530]]
        %v1021 = vstv %s1020
        %v1022 = vmul.f32 %v1021, %v947
        %v1023 = vmul.f32 %v1021, %v948
        %v1024 = vmul.f32 %v1021, %v949
        %v1028 = vrot.slane %v1022, 1
        %v1029 = vrot.slane %v1023, 1
        %v1030 = vsel %vm498, %v1028, %v1029
        %v1031 = vrot.slane %v1024, 1
        %v1032 = vsel %vm498, %v1029, %v1031
        %1033 = vrot.lane.b32.xlu0 %v1030, 126
        %v1034 = vpop.permute.xlu0 %1033
        %1035 = vrot.lane.b32.xlu0 %v1032, 126
        %v1036 = vpop.permute.xlu0 %1035
        %v1039 = vadd.f32 %v1018, %v1034
        %v1040 = vadd.f32 %v1019, %v1036
        %s1041 = sld [smem:[#allocation2 + %s552]]
        %v1042 = vstv %s1041
        %v1043 = vmul.f32 %v1042, %v947
        %v1044 = vmul.f32 %v1042, %v948
        %v1045 = vmul.f32 %v1042, %v949
        %v1049 = vrot.slane %v1043, 2
        %v1050 = vrot.slane %v1044, 2
        %v1051 = vsel %vm561, %v1049, %v1050
        %v1052 = vrot.slane %v1045, 2
        %v1053 = vsel %vm561, %v1050, %v1052
        %v1056 = vadd.f32 %v1039, %v1051
        %v1057 = vadd.f32 %v1040, %v1053
        %s1058 = sld [smem:[#allocation2 + %s571]]
        %v1059 = vstv %s1058
        %v1060 = vmul.f32 %v1059, %v947
        %v1061 = vmul.f32 %v1059, %v948
        %v1062 = vmul.f32 %v1059, %v949
        %v1066 = vrot.slane %v1060, 2
        %v1067 = vrot.slane %v1061, 2
        %v1068 = vsel %vm561, %v1066, %v1067
        %v1069 = vrot.slane %v1062, 2
        %v1070 = vsel %vm561, %v1067, %v1069
        %1071 = vrot.lane.b32.xlu0 %v1068, 127
        %v1072 = vpop.permute.xlu0 %1071
        %1073 = vrot.lane.b32.xlu0 %v1070, 127
        %v1074 = vpop.permute.xlu0 %1073
        %v1077 = vadd.f32 %v1056, %v1072
        %v1078 = vadd.f32 %v1057, %v1074
        %s1079 = sld [smem:[#allocation2 + %s593]]
        %v1080 = vstv %s1079
        %v1081 = vmul.f32 %v1080, %v947
        %v1082 = vmul.f32 %v1080, %v948
        %v1083 = vmul.f32 %v1080, %v949
        %v1087 = vrot.slane %v1081, 2
        %v1088 = vrot.slane %v1082, 2
        %v1089 = vsel %vm561, %v1087, %v1088
        %v1090 = vrot.slane %v1083, 2
        %v1091 = vsel %vm561, %v1088, %v1090
        %1092 = vrot.lane.b32.xlu0 %v1089, 126
        %v1093 = vpop.permute.xlu0 %1092
        %1094 = vrot.lane.b32.xlu0 %v1091, 126
        %v1095 = vpop.permute.xlu0 %1094
        %v1098 = vadd.f32 %v1077, %v1093
        %v1099 = vadd.f32 %v1078, %v1095
        %s1100 = scalar_lea.vmem %s408, 24 [#allocation6]
        %v1101 = vld [vmem:[%s1100] sm:$0xff]
        %v1102 = vld [vmem:[%s1100 + $0x8] sm:$0xff]
        %v1103 = vld [vmem:[%s1100 + $0x10] sm:$0x3]
        %s1104 = sld [smem:[#allocation2 + %s618]]
        %v1105 = vstv %s1104
        %v1106 = vmul.f32 %v1105, %v1101
        %v1107 = vmul.f32 %v1105, %v1102
        %s1108 = sld [smem:[#allocation2 + %s623]]
        %v1109 = vstv %s1108
        %v1110 = vmul.f32 %v1109, %v1101
        %v1111 = vmul.f32 %v1109, %v1102
        %1114 = vrot.lane.b32.xlu0 %v1110, 127
        %v1115 = vpop.permute.xlu0 %1114
        %1116 = vrot.lane.b32.xlu0 %v1111, 127
        %v1117 = vpop.permute.xlu0 %1116
        %v1120 = vadd.f32 %v1106, %v1115
        %v1121 = vadd.f32 %v1107, %v1117
        %s1122 = sld [smem:[#allocation2 + %s638]]
        %v1123 = vstv %s1122
        %v1124 = vmul.f32 %v1123, %v1101
        %v1125 = vmul.f32 %v1123, %v1102
        %1128 = vrot.lane.b32.xlu0 %v1124, 126
        %v1129 = vpop.permute.xlu0 %1128
        %1130 = vrot.lane.b32.xlu0 %v1125, 126
        %v1131 = vpop.permute.xlu0 %1130
        %v1134 = vadd.f32 %v1120, %v1129
        %v1135 = vadd.f32 %v1121, %v1131
        %s1136 = sld [smem:[#allocation2 + %s653]]
        %v1137 = vstv %s1136
        %v1138 = vmul.f32 %v1137, %v1101
        %v1139 = vmul.f32 %v1137, %v1102
        %v1140 = vmul.f32 %v1137, %v1103
        %v1144 = vrot.slane %v1138, 1
        %v1145 = vrot.slane %v1139, 1
        %v1146 = vsel %vm498, %v1144, %v1145
        %v1147 = vrot.slane %v1140, 1
        %v1148 = vsel %vm498, %v1145, %v1147
        %v1151 = vadd.f32 %v1134, %v1146
        %v1152 = vadd.f32 %v1135, %v1148
        %s1153 = sld [smem:[#allocation2 + %s671]]
        %v1154 = vstv %s1153
        %v1155 = vmul.f32 %v1154, %v1101
        %v1156 = vmul.f32 %v1154, %v1102
        %v1157 = vmul.f32 %v1154, %v1103
        %v1161 = vrot.slane %v1155, 1
        %v1162 = vrot.slane %v1156, 1
        %v1163 = vsel %vm498, %v1161, %v1162
        %v1164 = vrot.slane %v1157, 1
        %v1165 = vsel %vm498, %v1162, %v1164
        %1166 = vrot.lane.b32.xlu0 %v1163, 127
        %v1167 = vpop.permute.xlu0 %1166
        %1168 = vrot.lane.b32.xlu0 %v1165, 127
        %v1169 = vpop.permute.xlu0 %1168
        %v1172 = vadd.f32 %v1151, %v1167
        %v1173 = vadd.f32 %v1152, %v1169
        %s1174 = sld [smem:[#allocation2 + %s693]]
        %v1175 = vstv %s1174
        %v1176 = vmul.f32 %v1175, %v1101
        %v1177 = vmul.f32 %v1175, %v1102
        %v1178 = vmul.f32 %v1175, %v1103
        %v1182 = vrot.slane %v1176, 1
        %v1183 = vrot.slane %v1177, 1
        %v1184 = vsel %vm498, %v1182, %v1183
        %v1185 = vrot.slane %v1178, 1
        %v1186 = vsel %vm498, %v1183, %v1185
        %1187 = vrot.lane.b32.xlu0 %v1184, 126
        %v1188 = vpop.permute.xlu0 %1187
        %1189 = vrot.lane.b32.xlu0 %v1186, 126
        %v1190 = vpop.permute.xlu0 %1189
        %v1193 = vadd.f32 %v1172, %v1188
        %v1194 = vadd.f32 %v1173, %v1190
        %s1195 = sld [smem:[#allocation2 + %s715]]
        %v1196 = vstv %s1195
        %v1197 = vmul.f32 %v1196, %v1101
        %v1198 = vmul.f32 %v1196, %v1102
        %v1199 = vmul.f32 %v1196, %v1103
        %v1203 = vrot.slane %v1197, 2
        %v1204 = vrot.slane %v1198, 2
        %v1205 = vsel %vm561, %v1203, %v1204
        %v1206 = vrot.slane %v1199, 2
        %v1207 = vsel %vm561, %v1204, %v1206
        %v1210 = vadd.f32 %v1193, %v1205
        %v1211 = vadd.f32 %v1194, %v1207
        %s1212 = sld [smem:[#allocation2 + %s733]]
        %v1213 = vstv %s1212
        %v1214 = vmul.f32 %v1213, %v1101
        %v1215 = vmul.f32 %v1213, %v1102
        %v1216 = vmul.f32 %v1213, %v1103
        %v1220 = vrot.slane %v1214, 2
        %v1221 = vrot.slane %v1215, 2
        %v1222 = vsel %vm561, %v1220, %v1221
        %v1223 = vrot.slane %v1216, 2
        %v1224 = vsel %vm561, %v1221, %v1223
        %1225 = vrot.lane.b32.xlu0 %v1222, 127
        %v1226 = vpop.permute.xlu0 %1225
        %1227 = vrot.lane.b32.xlu0 %v1224, 127
        %v1228 = vpop.permute.xlu0 %1227
        %v1231 = vadd.f32 %v1210, %v1226
        %v1232 = vadd.f32 %v1211, %v1228
        %s1233 = sld [smem:[#allocation2 + %s755]]
        %v1234 = vstv %s1233
        %v1235 = vmul.f32 %v1234, %v1101
        %v1236 = vmul.f32 %v1234, %v1102
        %v1237 = vmul.f32 %v1234, %v1103
        %v1241 = vrot.slane %v1235, 2
        %v1242 = vrot.slane %v1236, 2
        %v1243 = vsel %vm561, %v1241, %v1242
        %v1244 = vrot.slane %v1237, 2
        %v1245 = vsel %vm561, %v1242, %v1244
        %1246 = vrot.lane.b32.xlu0 %v1243, 126
        %v1247 = vpop.permute.xlu0 %1246
        %1248 = vrot.lane.b32.xlu0 %v1245, 126
        %v1249 = vpop.permute.xlu0 %1248
        %v1252 = vadd.f32 %v1231, %v1247
        %v1253 = vadd.f32 %v1232, %v1249
        %v1254 = vadd.f32 %v1098, %v1252
        %v1255 = vadd.f32 %v1099, %v1253
        %s1256 = scalar_lea.vmem %s415, 24 [#allocation7]
        %v1257 = vld [vmem:[%s1256] sm:$0xff]
        %v1258 = vld [vmem:[%s1256 + $0x8] sm:$0xff]
        %v1259 = vld [vmem:[%s1256 + $0x10] sm:$0x3]
        %s1260 = sld [smem:[#allocation2 + %s782]]
        %v1261 = vstv %s1260
        %v1262 = vmul.f32 %v1261, %v1257
        %v1263 = vmul.f32 %v1261, %v1258
        %s1264 = sld [smem:[#allocation2 + %s787]]
        %v1265 = vstv %s1264
        %v1266 = vmul.f32 %v1265, %v1257
        %v1267 = vmul.f32 %v1265, %v1258
        %1270 = vrot.lane.b32.xlu0 %v1266, 127
        %v1271 = vpop.permute.xlu0 %1270
        %1272 = vrot.lane.b32.xlu0 %v1267, 127
        %v1273 = vpop.permute.xlu0 %1272
        %v1276 = vadd.f32 %v1262, %v1271
        %v1277 = vadd.f32 %v1263, %v1273
        %s1278 = sld [smem:[#allocation2 + %s802]]
        %v1279 = vstv %s1278
        %v1280 = vmul.f32 %v1279, %v1257
        %v1281 = vmul.f32 %v1279, %v1258
        %1284 = vrot.lane.b32.xlu0 %v1280, 126
        %v1285 = vpop.permute.xlu0 %1284
        %1286 = vrot.lane.b32.xlu0 %v1281, 126
        %v1287 = vpop.permute.xlu0 %1286
        %v1290 = vadd.f32 %v1276, %v1285
        %v1291 = vadd.f32 %v1277, %v1287
        %s1292 = sld [smem:[#allocation2 + %s817]]
        %v1293 = vstv %s1292
        %v1294 = vmul.f32 %v1293, %v1257
        %v1295 = vmul.f32 %v1293, %v1258
        %v1296 = vmul.f32 %v1293, %v1259
        %v1300 = vrot.slane %v1294, 1
        %v1301 = vrot.slane %v1295, 1
        %v1302 = vsel %vm498, %v1300, %v1301
        %v1303 = vrot.slane %v1296, 1
        %v1304 = vsel %vm498, %v1301, %v1303
        %v1307 = vadd.f32 %v1290, %v1302
        %v1308 = vadd.f32 %v1291, %v1304
        %s1309 = sld [smem:[#allocation2 + %s835]]
        %v1310 = vstv %s1309
        %v1311 = vmul.f32 %v1310, %v1257
        %v1312 = vmul.f32 %v1310, %v1258
        %v1313 = vmul.f32 %v1310, %v1259
        %v1317 = vrot.slane %v1311, 1
        %v1318 = vrot.slane %v1312, 1
        %v1319 = vsel %vm498, %v1317, %v1318
        %v1320 = vrot.slane %v1313, 1
        %v1321 = vsel %vm498, %v1318, %v1320
        %1322 = vrot.lane.b32.xlu0 %v1319, 127
        %v1323 = vpop.permute.xlu0 %1322
        %1324 = vrot.lane.b32.xlu0 %v1321, 127
        %v1325 = vpop.permute.xlu0 %1324
        %v1328 = vadd.f32 %v1307, %v1323
        %v1329 = vadd.f32 %v1308, %v1325
        %s1330 = sld [smem:[#allocation2 + %s857]]
        %v1331 = vstv %s1330
        %v1332 = vmul.f32 %v1331, %v1257
        %v1333 = vmul.f32 %v1331, %v1258
        %v1334 = vmul.f32 %v1331, %v1259
        %v1338 = vrot.slane %v1332, 1
        %v1339 = vrot.slane %v1333, 1
        %v1340 = vsel %vm498, %v1338, %v1339
        %v1341 = vrot.slane %v1334, 1
        %v1342 = vsel %vm498, %v1339, %v1341
        %1343 = vrot.lane.b32.xlu0 %v1340, 126
        %v1344 = vpop.permute.xlu0 %1343
        %1345 = vrot.lane.b32.xlu0 %v1342, 126
        %v1346 = vpop.permute.xlu0 %1345
        %v1349 = vadd.f32 %v1328, %v1344
        %v1350 = vadd.f32 %v1329, %v1346
        %s1351 = sld [smem:[#allocation2 + %s879]]
        %v1352 = vstv %s1351
        %v1353 = vmul.f32 %v1352, %v1257
        %v1354 = vmul.f32 %v1352, %v1258
        %v1355 = vmul.f32 %v1352, %v1259
        %v1359 = vrot.slane %v1353, 2
        %v1360 = vrot.slane %v1354, 2
        %v1361 = vsel %vm561, %v1359, %v1360
        %v1362 = vrot.slane %v1355, 2
        %v1363 = vsel %vm561, %v1360, %v1362
        %v1366 = vadd.f32 %v1349, %v1361
        %v1367 = vadd.f32 %v1350, %v1363
        %s1368 = sld [smem:[#allocation2 + %s897]]
        %v1369 = vstv %s1368
        %v1370 = vmul.f32 %v1369, %v1257
        %v1371 = vmul.f32 %v1369, %v1258
        %v1372 = vmul.f32 %v1369, %v1259
        %v1376 = vrot.slane %v1370, 2
        %v1377 = vrot.slane %v1371, 2
        %v1378 = vsel %vm561, %v1376, %v1377
        %v1379 = vrot.slane %v1372, 2
        %v1380 = vsel %vm561, %v1377, %v1379
        %1381 = vrot.lane.b32.xlu0 %v1378, 127
        %v1382 = vpop.permute.xlu0 %1381
        %1383 = vrot.lane.b32.xlu0 %v1380, 127
        %v1384 = vpop.permute.xlu0 %1383
        %v1387 = vadd.f32 %v1366, %v1382
        %v1388 = vadd.f32 %v1367, %v1384
        %s1389 = sld [smem:[#allocation2 + %s919]]
        %v1390 = vstv %s1389
        %v1391 = vmul.f32 %v1390, %v1257
        %v1392 = vmul.f32 %v1390, %v1258
        %v1393 = vmul.f32 %v1390, %v1259
        %v1397 = vrot.slane %v1391, 2
        %v1398 = vrot.slane %v1392, 2
        %v1399 = vsel %vm561, %v1397, %v1398
        %v1400 = vrot.slane %v1393, 2
        %v1401 = vsel %vm561, %v1398, %v1400
        %1402 = vrot.lane.b32.xlu0 %v1399, 126
        %v1403 = vpop.permute.xlu0 %1402
        %1404 = vrot.lane.b32.xlu0 %v1401, 126
        %v1405 = vpop.permute.xlu0 %1404
        %v1408 = vadd.f32 %v1387, %v1403
        %v1409 = vadd.f32 %v1388, %v1405
        %v1410 = vadd.f32 %v1254, %v1408
        %v1411 = vadd.f32 %v1255, %v1409
        %s1412 = scalar_lea.vmem %s446, 16 [#allocation8]
        %1413 = vst.msk [vmem:[%s1412] sm:$0xff] %vm943, %v1410
        %1414 = vst.msk [vmem:[%s1412 + $0x8] sm:$0xff] %vm943, %v1411
        %s1415 = sand.u32 %s146, 1
        %s1416 = scalar_lea.sflag [#allocation3], %s1415
        %s1417 = sand.u32 %s146, 1
        %s1418 = smul.addr %s1417, 32
        %s1419 = scalar_lea.vmem [#allocation8], %s1418
        // Predicated region
        $region155: #{tpu_custom_call.1} parent=137 // pred_check
          %p1420 = pneg %p156
        $region156: #{tpu_custom_call.1} parent=137 // pred_check_branch
          %1422 = sbr.rel (%p1420) target = $region158
        $region157: #{tpu_custom_call.1} parent=137 // pred_region
          #allocation10 [shape = 'u32[6]{0}', space=smem, size = 0x18, scoped, tag = 'DMA stride descriptor']
          %s1423 = smul.u32 2, %s24
          %1425 = vsyncadd %s1416, 0
          %s1426 = smul.addr %s23, 2
          %s1427 = smul.addr %s1423, 8
          %s1428 = sadd.s32 %s1426, %s1427
          %s1429 = smul.addr %s1428, 8
          %s1430 = scalar_lea.hbm %s4, %s1429
          %s1432 = sshll.u32 1, 14
          %s1433 = sxor.u32 4294967295, %s1432
          %s1436 = sshll.u32 7, 18
          %s1437 = sxor.u32 4294967295, %s1436
          %s1438 = sand.u32 0, %s1437
          %s1440 = sor.u32 %s1438, 0
          %s1441 = sshll.u32 %s1419, 4
          %s1442 = int_to_ptr.vmem [resolvable:$true] %s1441
          %s1443 = sshll.u32 %s1430, 4
          %s1444 = int_to_ptr.hbm [resolvable:$true] %s1443
          %1450 = sst [smem:[#allocation10]] 256
          %s1451 = scalar_lea.smem [#allocation10], 1
          %1452 = sst [smem:[%s1451]] 1024
          %s1453 = scalar_lea.smem [#allocation10], 2
          %1454 = sst [smem:[%s1453]] 2
          %s1455 = scalar_lea.smem [#allocation10], 3
          %1456 = sst [smem:[%s1455]] 128
          %s1457 = scalar_lea.smem [#allocation10], 4
          %1458 = sst [smem:[%s1457]] 128
          %s1459 = scalar_lea.smem [#allocation10], 5
          %1460 = sst [smem:[%s1459]] 8
          %1462 = dma.general %s1442, 512, %s1444, %s1416, [#allocation9], [#allocation10], %s1440, 0
        $region158: #{tpu_custom_call.1} parent=137 // pred_fallthru
          _
      $region138: #{tpu_custom_call.1} parent=5 // pred_fallthru
        _
      %p1463 = scmp.le.s32.totalorder 2, %s14
      // Predicated region
      $region159: #{tpu_custom_call.1} parent=5 // pred_check
        %p1464 = pneg %p1463
      $region160: #{tpu_custom_call.1} parent=5 // pred_check_branch
        %1466 = sbr.rel (%p1464) target = $region162
      $region161: #{tpu_custom_call.1} parent=5 // pred_region
        %s1467 = ssub.s32 %s14, 2
        // Predicated region
        $region163: #{tpu_custom_call.1} parent=161 // pred_check
          %p1468 = pneg %p162
        $region164: #{tpu_custom_call.1} parent=161 // pred_check_branch
          %1470 = sbr.rel (%p1468) target = $region166
        $region165: #{tpu_custom_call.1} parent=161 // pred_region
          %s1471 = sand.u32 %s147, 1
          %s1472 = scalar_lea.sflag [#allocation3], %s1471
          %s1473 = sand.u32 %s147, 1
          %s1474 = smul.addr %s1473, 32
          %s1475 = scalar_lea.vmem [#allocation8], %s1474
          %1477 = dma.done %s1472, 512
        $region166: #{tpu_custom_call.1} parent=161 // pred_fallthru
          _
      $region162: #{tpu_custom_call.1} parent=5 // pred_fallthru
        _
    $region6: #{tpu_custom_call.1} parent=1 // loop_footer
      %s18 = sadd.s32 1, %s14
    $region7: #{tpu_custom_call.1} parent=1 // loop_footer_branch
      %13 = sbr.rel target = $region3
    $region8: #{tpu_custom_call.1} parent=1 // loop_exit
      _
    %1478 = vsyncpa [#allocation3], 1
    %s1479 = scalar_lea.sflag [#allocation3], 1
    %1480 = vsyncpa %s1479, 1
    %1481 = vsyncpa [#allocation4], 1
    %s1482 = scalar_lea.sflag [#allocation4], 1
    %1483 = vsyncpa %s1482, 1

</llo_original>
